<compile_context>
chip_gen: v7x
topology: tpu7x:2x2x1
jax: 0.10.0
libtpu: 0.0.40
codegen_flags: <defaults>
</compile_context>

<pallas_src>
import jax
import jax.numpy as jnp
from jax.experimental import pallas as pl
from jax.experimental.pallas import tpu as pltpu

EPS = 1e-5
_MAX_TILE_C = 1024          # lanes; upper bound on a single block's feature tile
_VMEM_BUDGET_FRACTION = 0.70  # leave headroom for compiler scratch / regalloc


def _round_up(x, m):
    return ((x + m - 1) // m) * m


def _vmem_capacity_bytes():
    """Physical VMEM per TensorCore; conservative fallback if the query fails."""
    try:
        info = pltpu.get_tpu_info()
        cap = getattr(info, "vmem_capacity_bytes", None)
        if cap:
            return int(cap)
    except Exception:
        pass
    return 64 * 1024 * 1024  # v7x per-TC VMEM (smallest of the three generations)


def _step_bytes(n, tile_c, num_classes, x_bytes):
    """Estimated VMEM working set for one grid step, including pipeline
    double-buffers AND the in-kernel full-tile f32 temporaries."""
    pipe = 2 * (2 * n * tile_c * x_bytes)                    # x-in + out tiles, double-buffered
    pipe += 2 * (n * _round_up(num_classes, 128) * 2)        # bf16 one-hot (lane-padded)
    pipe += 2 * (2 * num_classes * tile_c * 4)               # f32 gamma/beta table tiles
    temps = 5 * n * tile_c * 4                               # x_f32, x*x, gamma, beta, result
    return pipe + temps


def _choose_tile_c(n, c, num_classes, x_bytes, vmem_bytes):
    """Largest 128-multiple lane tile (<= _MAX_TILE_C) fitting the VMEM budget;
    prefer grid_c >= 2 so the C axis shards across v7x's two TensorCores.
    Returns None if even the minimum tile does not fit (caller falls back)."""
    budget = int(vmem_bytes * _VMEM_BUDGET_FRACTION)
    c_pad = _round_up(c, 128)
    candidates = list(range(128, min(_MAX_TILE_C, c_pad) + 1, 128))
    fitting = [tc for tc in candidates if _step_bytes(n, tc, num_classes, x_bytes) <= budget]
    if not fitting:
        return None
    pref = [tc for tc in fitting if pl.cdiv(c, tc) >= 2]
    return max(pref) if pref else max(fitting)


def _cbn_kernel(x_ref, onehot_ref, gamma_tab_ref, beta_tab_ref, o_ref):
    # x tile: (N, TILE_C) -- full batch resident, so per-feature stats are exact.
    x = x_ref[...].astype(jnp.float32)
    n = x.shape[0]
    inv_n = jnp.float32(1.0 / n)

    # Single-pass batch statistics: one sum + one sum-of-squares (XLU), two muls.
    s = jnp.sum(x, axis=0, keepdims=True)             # (1, TILE_C)
    ssq = jnp.sum(x * x, axis=0, keepdims=True)       # (1, TILE_C)
    mean = s * inv_n
    # Clamp: E[x^2] - mean^2 can go slightly negative from f32 cancellation.
    var = jnp.maximum(ssq * inv_n - mean * mean, 0.0)
    inv_std = jax.lax.rsqrt(var + EPS)                # EUP slot (cheap)

    # Embedding gather fused as a one-hot matmul; one-hot precomputed in the
    # wrapper (bf16 is exact for 0/1), no per-step iota/compare work.
    onehot = onehot_ref[...].astype(jnp.float32)      # (N, NUM_CLASSES)

    # Fold inv_std into the tiny (num_classes, TILE_C) table BEFORE the gather:
    # the matmul then yields gamma[y] * inv_std directly -- no (N, TILE_C)
    # "scale" temporary, one fewer full-tile VALU multiply.
    scaled_gamma_tab = gamma_tab_ref[...] * inv_std   # (NUM_CLASSES, TILE_C)
    gamma = jnp.dot(onehot, scaled_gamma_tab,
                    precision=jax.lax.Precision.HIGHEST,
                    preferred_element_type=jnp.float32)       # (N, TILE_C)
    beta = jnp.dot(onehot, beta_tab_ref[...],
                   precision=jax.lax.Precision.HIGHEST,
                   preferred_element_type=jnp.float32)        # (N, TILE_C)

    o_ref[...] = ((x - mean) * gamma + beta).astype(o_ref.dtype)


def reference_jax(x, y, embed_weight, num_features):
    """Pure-JAX reference (also serves as the small-problem / huge-N fast path)."""
    mean = jnp.mean(x, axis=0, keepdims=True)
    var = jnp.mean((x - mean) ** 2, axis=0, keepdims=True)
    out = (x - mean) / jnp.sqrt(var + EPS)
    emb = embed_weight[y]
    gamma = emb[:, :num_features]
    beta = emb[:, num_features:]
    return gamma * out + beta


def conditional_batch_norm_1d(x, y, embed_weight, num_features):
    """x: (N, C) float, y: (N,) int, embed_weight: (num_classes, 2*C).

    Returns gamma[y] * batchnorm(x) + beta[y]  (training-mode batch statistics).
    """
    n, c = x.shape
    num_classes, two_c = embed_weight.shape
    assert c == num_features and two_c == 2 * num_features

    # Small-problem fast path: sub-128-lane outputs hit masked vst.msk stores and
    # per-grid-step overhead dominates tiny shapes -- Pallas has no win here.
    if c < 128 or n * c <= 8192:
        return reference_jax(x, y, embed_weight, num_features)

    x_bytes = jnp.dtype(x.dtype).itemsize
    vmem_bytes = _vmem_capacity_bytes()
    tile_c = _choose_tile_c(n, c, num_classes, x_bytes, vmem_bytes)
    if tile_c is None:
        # Full batch does not fit VMEM even at the minimum 128-lane tile.
        # TODO(synk): two-pass grid over an "arbitrary" N axis for very large N.
        return reference_jax(x, y, embed_weight, num_features)

    grid_c = pl.cdiv(c, tile_c)

    # Tiny O(num_classes * C) tables (f32 for exactness) split so gamma/beta
    # columns tile along the same lane grid as x; one-hot precomputed in bf16.
    gamma_tab = embed_weight[:, :num_features].astype(jnp.float32)
    beta_tab = embed_weight[:, num_features:].astype(jnp.float32)
    onehot = jax.nn.one_hot(y.astype(jnp.int32), num_classes, dtype=jnp.bfloat16)

    # VMEM budget includes pipeline double-buffers AND in-kernel f32 temporaries;
    # no artificial 32 MiB cap (v5e/v6e have 128 MiB physical, v7x has 64 MiB).
    est = _step_bytes(n, tile_c, num_classes, x_bytes)
    vmem_limit = int(min(0.9 * vmem_bytes, max(1.5 * est, 16 * 1024 * 1024)))

    return pl.pallas_call(
        _cbn_kernel,
        out_shape=jax.ShapeDtypeStruct((n, c), x.dtype),
        grid_spec=pltpu.PrefetchScalarGridSpec(
            num_scalar_prefetch=0,
            grid=(grid_c,),
            in_specs=[
                pl.BlockSpec((n, tile_c), lambda j: (0, j)),            # x tile
                pl.BlockSpec((n, num_classes), lambda j: (0, 0)),       # one-hot (resident)
                pl.BlockSpec((num_classes, tile_c), lambda j: (0, j)),  # gamma cols
                pl.BlockSpec((num_classes, tile_c), lambda j: (0, j)),  # beta cols
            ],
            out_specs=pl.BlockSpec((n, tile_c), lambda j: (0, j)),
        ),
        compiler_params=pltpu.CompilerParams(
            dimension_semantics=("parallel",),   # shards C-tiles across TCs on v7x
            vmem_limit_bytes=vmem_limit,
        ),
    )(x, onehot, gamma_tab, beta_tab)


if __name__ == "__main__":
    key = jax.random.PRNGKey(0)
    kx, ky, kw, kx2, ky2 = jax.random.split(key, 5)

    num_classes = 4

    # ---- Pallas-path test: C >= 128 so the kernel (not the fast path) runs. ----
    batch, num_features = 128, 256
    # Parameter init matching the PyTorch __init__:
    #   embed.weight[:, :C] ~ Normal(1, 0.02); embed.weight[:, C:] = 0
    gamma_part = 1.0 + 0.02 * jax.random.normal(
        kw, (num_classes, num_features), jnp.float32)
    beta_part = jnp.zeros((num_classes, num_features), jnp.float32)
    embed_weight = jnp.concatenate([gamma_part, beta_part], axis=1)  # (classes, 2C)

    x = jax.random.normal(kx, (batch, num_features), jnp.float32)
    y = jax.random.randint(ky, (batch,), 0, num_classes, jnp.int32)

    out = conditional_batch_norm_1d(x, y, embed_weight, num_features)
    out = jax.block_until_ready(out)

    ref = reference_jax(x, y, embed_weight, num_features)
    assert out.shape == (batch, num_features)
    assert jnp.allclose(out, ref, atol=1e-4, rtol=1e-4), "Pallas path mismatch vs reference"

    # ---- Tiny-shape sanity (routes through the small-problem fast path). ----
    nf_small = 32
    ew_small = jnp.concatenate(
        [1.0 + 0.02 * jax.random.normal(kw, (num_classes, nf_small), jnp.float32),
         jnp.zeros((num_classes, nf_small), jnp.float32)], axis=1)
    x_small = jax.random.normal(kx2, (8, nf_small), jnp.float32)
    y_small = jax.random.randint(ky2, (8,), 0, num_classes, jnp.int32)
    out_small = jax.block_until_ready(
        conditional_batch_norm_1d(x_small, y_small, ew_small, nf_small))
    assert out_small.shape == (8, nf_small)

    print("KERNEL_OK")
</pallas_src>

<mosaic_0001>
module attributes {stable_mosaic.version = 11 : i64} {
  func.func @_cbn_kernel(%arg0: i32, %arg1: memref<128x128xf32, #tpu.memory_space<vmem>>, %arg2: memref<128x4xbf16, #tpu.memory_space<vmem>>, %arg3: memref<4x128xf32, #tpu.memory_space<vmem>>, %arg4: memref<4x128xf32, #tpu.memory_space<vmem>>, %arg5: memref<128x128xf32, #tpu.memory_space<vmem>>) attributes {dimension_semantics = [#tpu.dimension_semantics<parallel>], iteration_bounds = array<i64: 2>, scalar_prefetch = 0 : i64, scratch_operands = 0 : i64, tpu.core_type = #tpu.core_type<tc>, window_params = [{transform_indices = @transform_0, window_bounds = array<i64: 128, 128>}, {pipeline_mode = #tpu.pipeline_mode<synchronous>, transform_indices = @transform_1, window_bounds = array<i64: 128, 4>}, {transform_indices = @transform_2, window_bounds = array<i64: 4, 128>}, {transform_indices = @transform_3, window_bounds = array<i64: 4, 128>}, {transform_indices = @transform_4, window_bounds = array<i64: 128, 128>}]} {
    %c0 = arith.constant 0 : index
    %c0_0 = arith.constant 0 : index
    %0 = vector.load %arg1[%c0, %c0_0] : memref<128x128xf32, #tpu.memory_space<vmem>>, vector<128x128xf32>
    %cst = arith.constant dense<0.000000e+00> : vector<128xf32>
    %1 = vector.multi_reduction <add>, %0, %cst [0] : vector<128x128xf32> to vector<128xf32>
    %2 = vector.shape_cast %1 : vector<128xf32> to vector<1x128xf32>
    %3 = arith.mulf %0, %0 : vector<128x128xf32>
    %cst_1 = arith.constant dense<0.000000e+00> : vector<128xf32>
    %4 = vector.multi_reduction <add>, %3, %cst_1 [0] : vector<128x128xf32> to vector<128xf32>
    %5 = vector.shape_cast %4 : vector<128xf32> to vector<1x128xf32>
    %cst_2 = arith.constant 7.812500e-03 : f32
    %6 = vector.broadcast %cst_2 : f32 to vector<1x128xf32>
    %7 = arith.mulf %2, %6 : vector<1x128xf32>
    %cst_3 = arith.constant 7.812500e-03 : f32
    %8 = vector.broadcast %cst_3 : f32 to vector<1x128xf32>
    %9 = arith.mulf %5, %8 : vector<1x128xf32>
    %10 = arith.mulf %7, %7 : vector<1x128xf32>
    %11 = arith.subf %9, %10 : vector<1x128xf32>
    %cst_4 = arith.constant 0.000000e+00 : f32
    %12 = vector.broadcast %cst_4 : f32 to vector<1x128xf32>
    %13 = arith.maximumf %11, %12 : vector<1x128xf32>
    %cst_5 = arith.constant 9.99999974E-6 : f32
    %14 = vector.broadcast %cst_5 : f32 to vector<1x128xf32>
    %15 = arith.addf %13, %14 : vector<1x128xf32>
    %16 = math.rsqrt %15 : vector<1x128xf32>
    %c0_6 = arith.constant 0 : index
    %c0_7 = arith.constant 0 : index
    %17 = vector.load %arg2[%c0_6, %c0_7] : memref<128x4xbf16, #tpu.memory_space<vmem>>, vector<128x4xbf16>
    %18 = arith.extf %17 : vector<128x4xbf16> to vector<128x4xf32>
    %c0_8 = arith.constant 0 : index
    %c0_9 = arith.constant 0 : index
    %19 = vector.load %arg3[%c0_8, %c0_9] : memref<4x128xf32, #tpu.memory_space<vmem>>, vector<4x128xf32>
    %20 = vector.broadcast %16 : vector<1x128xf32> to vector<4x128xf32>
    %21 = arith.mulf %19, %20 : vector<4x128xf32>
    %cst_10 = arith.constant dense<0.000000e+00> : vector<128x128xf32>
    %22 = tpu.matmul %18, %21, %cst_10 {dimension_numbers = #tpu.dot_dimension_numbers<[1], [0], [0], [1], [0, 0, 1, 1], [], []>, precision = #tpu.contract_precision<fp32>} : vector<128x4xf32>, vector<4x128xf32>, vector<128x128xf32> -> vector<128x128xf32>
    %c0_11 = arith.constant 0 : index
    %c0_12 = arith.constant 0 : index
    %23 = vector.load %arg4[%c0_11, %c0_12] : memref<4x128xf32, #tpu.memory_space<vmem>>, vector<4x128xf32>
    %cst_13 = arith.constant dense<0.000000e+00> : vector<128x128xf32>
    %24 = tpu.matmul %18, %23, %cst_13 {dimension_numbers = #tpu.dot_dimension_numbers<[1], [0], [0], [1], [0, 0, 1, 1], [], []>, precision = #tpu.contract_precision<fp32>} : vector<128x4xf32>, vector<4x128xf32>, vector<128x128xf32> -> vector<128x128xf32>
    %25 = vector.broadcast %7 : vector<1x128xf32> to vector<128x128xf32>
    %26 = arith.subf %0, %25 : vector<128x128xf32>
    %27 = arith.mulf %26, %22 : vector<128x128xf32>
    %28 = arith.addf %27, %24 : vector<128x128xf32>
    %c0_14 = arith.constant 0 : index
    %c0_15 = arith.constant 0 : index
    %29 = vector.load %arg5[%c0_14, %c0_15] : memref<128x128xf32, #tpu.memory_space<vmem>>, vector<128x128xf32>
    tpu.vector_store %arg5[%c0_14, %c0_15], %28 {strides = array<i32>} : memref<128x128xf32, #tpu.memory_space<vmem>>, vector<128x128xf32>,
    return
  }
  func.func @transform_0(%arg0: i32) -> (i32, i32) {
    %c0_i32 = arith.constant 0 : i32
    %c0_i32_0 = arith.constant 0 : i32
    return %c0_i32, %arg0 : i32, i32
  }
  func.func @transform_1(%arg0: i32) -> (i32, i32) {
    %c0_i32 = arith.constant 0 : i32
    %c0_i32_0 = arith.constant 0 : i32
    %c0_i32_1 = arith.constant 0 : i32
    return %c0_i32, %c0_i32_0 : i32, i32
  }
  func.func @transform_2(%arg0: i32) -> (i32, i32) {
    %c0_i32 = arith.constant 0 : i32
    %c0_i32_0 = arith.constant 0 : i32
    return %c0_i32, %arg0 : i32, i32
  }
  func.func @transform_3(%arg0: i32) -> (i32, i32) {
    %c0_i32 = arith.constant 0 : i32
    %c0_i32_0 = arith.constant 0 : i32
    return %c0_i32, %arg0 : i32, i32
  }
  func.func @transform_4(%arg0: i32) -> (i32, i32) {
    %c0_i32 = arith.constant 0 : i32
    %c0_i32_0 = arith.constant 0 : i32
    return %c0_i32, %arg0 : i32, i32
  }
}

</mosaic_0001>

<llo_original>
// kernel: tpu_custom_call.1
$region0: #{tpu_custom_call.1}
  #allocation0 [shape = 'u32[]', space=smem, size = 0x4, offset = 0x4, fixed_abs, tag = 'smem constant byte address 0x4 - core index']
  #allocation1 [shape = 'u32[144,128]{1,0:T(1,128)}', space=vmem, size = 0x12000, scoped, tag = 'internal scratch']
  %s0 = inlined_call_operand.hbm [shape: f32[128,256], index: 0, kind: input, shape index: {}]
  %s1 = inlined_call_operand.vmem [shape: bf16[128,4], index: 1, kind: input, shape index: {}]
  %s2 = inlined_call_operand.vmem [shape: f32[4,256], index: 2, kind: input, shape index: {}]
  %s3 = inlined_call_operand.vmem [shape: f32[4,256], index: 3, kind: input, shape index: {}]
  %s4 = inlined_call_operand.hbm [shape: f32[128,256], index: 4, kind: output, shape index: {}]
  %s5 = sld [smem:[#allocation0]]
  $region53: #{tpu_custom_call.1} parent=0
    _
  %s7 = ssub.s32 1, %s5
  %s8 = scalar_select 0, %s7, %s5
  $region1: #{tpu_custom_call.1} parent=0
    #allocation2 [shape = 'u8[131072]{0}', space=vmem, size = 0x20000, scoped, tag = 'input window, operand 0']
    #allocation3 [shape = 's32[2]{0}', space=sflag, size = 0x8, scoped, tag = 'scoped memory for tpu_custom_call.1']
    #allocation4 [shape = 's32[2]{0}', space=sflag, size = 0x8, scoped, tag = 'scoped memory for tpu_custom_call.1']
    #allocation5 [shape = 'u8[131072]{0}', space=vmem, size = 0x20000, scoped, tag = 'output window, operand 0']
    %9 = vsyncpa [#allocation3], 0
    %s10 = scalar_lea.sflag [#allocation3], 1
    %11 = vsyncpa %s10, 0
    %12 = vsyncpa [#allocation4], 0
    %s13 = scalar_lea.sflag [#allocation4], 1
    %14 = vsyncpa %s13, 0
    loop: start=0, step=1, limit=4
    $region2: #{tpu_custom_call.1} parent=1 // loop_pre_header
      _
    $region3: #{tpu_custom_call.1} parent=1 // loop_header
      %s16 = sphi 0, %s20
      %p17 = scmp.ge.s32.totalorder %s16, 4
      %s26 = sphi 0, %s28
      %s29 = sphi 0, %s26
      %s30 = sphi 0, %s29
      %s46 = sphi 0, %s30
      %s50 = sphi 0, %s50
      %s52 = sphi 0, %s50
      %s53 = sphi 0, %s52
      %s67 = sphi 0, %s53
      %s73 = sphi 0, %s75
      %s76 = sphi 0, %s73
      %s77 = sphi 0, %s76
      %s93 = sphi 0, %s77
      %s99 = sphi 0, %s101
      %s102 = sphi 0, %s99
      %s103 = sphi 0, %s102
      %s119 = sphi 0, %s103
      %s125 = sphi 0, %s127
      %s128 = sphi 0, %s125
      %s129 = sphi 0, %s128
      %s145 = sphi 0, %s129
    $region4: #{tpu_custom_call.1} parent=1 // loop_header_branch
      %19 = sbr.rel (%p17) target = $region8
    $region5: #{tpu_custom_call.1} parent=1 // loop_body
      %s21 = ssub.s32 %s16, 1
      %s22 = ssub.s32 %s16, 2
      %s23 = sadd.s32 %s16, 1
      %s24 = ssub.s32 %s16, %s23
      %p25 = scmp.eq.s32.totalorder %s24, 0
      %s27 = sadd.s32 %s26, 1
      %s28 = scalar_select %p25, %s26, %s27
      %p31 = pneg %p25
      %p32 = scmp.eq.s32.totalorder %s16, 1
      %p33 = por %p31, %p32
      %p34 = scmp.ne.s32.totalorder %s26, %s29
      %p35 = scmp.eq.s32.totalorder %s16, 0
      %p36 = por %p34, %p35
      %p37 = scmp.ne.s32.totalorder %s26, %s29
      %p38 = scmp.eq.s32.totalorder %s21, 1
      %p39 = por %p37, %p38
      %p40 = scmp.ne.s32.totalorder %s29, %s30
      %p41 = scmp.eq.s32.totalorder %s21, 0
      %p42 = por %p40, %p41
      %p43 = scmp.ne.s32.totalorder %s29, %s30
      %p44 = scmp.eq.s32.totalorder %s22, 1
      %p45 = por %p43, %p44
      %p47 = scmp.ne.s32.totalorder %s30, %s46
      %p48 = scmp.eq.s32.totalorder %s22, 0
      %p49 = por %p47, %p48
      %s51 = sadd.s32 %s50, 1
      %p54 = scmp.eq.s32.totalorder %s16, 1
      %p55 = scmp.ne.s32.totalorder %s50, %s52
      %p56 = scmp.eq.s32.totalorder %s16, 0
      %p57 = por %p55, %p56
      %p58 = scmp.ne.s32.totalorder %s50, %s52
      %p59 = scmp.eq.s32.totalorder %s21, 1
      %p60 = por %p58, %p59
      %p61 = scmp.ne.s32.totalorder %s52, %s53
      %p62 = scmp.eq.s32.totalorder %s21, 0
      %p63 = por %p61, %p62
      %p64 = scmp.ne.s32.totalorder %s52, %s53
      %p65 = scmp.eq.s32.totalorder %s22, 1
      %p66 = por %p64, %p65
      %p68 = scmp.ne.s32.totalorder %s53, %s67
      %p69 = scmp.eq.s32.totalorder %s22, 0
      %p70 = por %p68, %p69
      %s71 = ssub.s32 %s16, %s23
      %p72 = scmp.eq.s32.totalorder %s71, 0
      %s74 = sadd.s32 %s73, 1
      %s75 = scalar_select %p72, %s73, %s74
      %p78 = pneg %p72
      %p79 = scmp.eq.s32.totalorder %s16, 1
      %p80 = por %p78, %p79
      %p81 = scmp.ne.s32.totalorder %s73, %s76
      %p82 = scmp.eq.s32.totalorder %s16, 0
      %p83 = por %p81, %p82
      %p84 = scmp.ne.s32.totalorder %s73, %s76
      %p85 = scmp.eq.s32.totalorder %s21, 1
      %p86 = por %p84, %p85
      %p87 = scmp.ne.s32.totalorder %s76, %s77
      %p88 = scmp.eq.s32.totalorder %s21, 0
      %p89 = por %p87, %p88
      %p90 = scmp.ne.s32.totalorder %s76, %s77
      %p91 = scmp.eq.s32.totalorder %s22, 1
      %p92 = por %p90, %p91
      %p94 = scmp.ne.s32.totalorder %s77, %s93
      %p95 = scmp.eq.s32.totalorder %s22, 0
      %p96 = por %p94, %p95
      %s97 = ssub.s32 %s16, %s23
      %p98 = scmp.eq.s32.totalorder %s97, 0
      %s100 = sadd.s32 %s99, 1
      %s101 = scalar_select %p98, %s99, %s100
      %p104 = pneg %p98
      %p105 = scmp.eq.s32.totalorder %s16, 1
      %p106 = por %p104, %p105
      %p107 = scmp.ne.s32.totalorder %s99, %s102
      %p108 = scmp.eq.s32.totalorder %s16, 0
      %p109 = por %p107, %p108
      %p110 = scmp.ne.s32.totalorder %s99, %s102
      %p111 = scmp.eq.s32.totalorder %s21, 1
      %p112 = por %p110, %p111
      %p113 = scmp.ne.s32.totalorder %s102, %s103
      %p114 = scmp.eq.s32.totalorder %s21, 0
      %p115 = por %p113, %p114
      %p116 = scmp.ne.s32.totalorder %s102, %s103
      %p117 = scmp.eq.s32.totalorder %s22, 1
      %p118 = por %p116, %p117
      %p120 = scmp.ne.s32.totalorder %s103, %s119
      %p121 = scmp.eq.s32.totalorder %s22, 0
      %p122 = por %p120, %p121
      %s123 = ssub.s32 %s16, %s23
      %p124 = scmp.eq.s32.totalorder %s123, 0
      %s126 = sadd.s32 %s125, 1
      %s127 = scalar_select %p124, %s125, %s126
      %p130 = pneg %p124
      %p131 = scmp.eq.s32.totalorder %s16, 1
      %p132 = por %p130, %p131
      %p133 = scmp.ne.s32.totalorder %s125, %s128
      %p134 = scmp.eq.s32.totalorder %s16, 0
      %p135 = por %p133, %p134
      %p136 = scmp.ne.s32.totalorder %s125, %s128
      %p137 = scmp.eq.s32.totalorder %s21, 1
      %p138 = por %p136, %p137
      %p139 = scmp.ne.s32.totalorder %s128, %s129
      %p140 = scmp.eq.s32.totalorder %s21, 0
      %p141 = por %p139, %p140
      %p142 = scmp.ne.s32.totalorder %s128, %s129
      %p143 = scmp.eq.s32.totalorder %s22, 1
      %p144 = por %p142, %p143
      %p146 = scmp.ne.s32.totalorder %s129, %s145
      %p147 = scmp.eq.s32.totalorder %s22, 0
      %p148 = por %p146, %p147
      %p149 = scmp.le.s32.totalorder 1, %s16
      %p150 = scmp.lt.s32.totalorder %s16, 3
      %p151 = pnand %p149, %p150
      %p152 = pneg %p151
      // Predicated region
      $region9: #{tpu_custom_call.1} parent=5 // pred_check
        _
      $region10: #{tpu_custom_call.1} parent=5 // pred_check_branch
        %154 = sbr.rel (%p151) target = $region12
      $region11: #{tpu_custom_call.1} parent=5 // pred_region
        %s155 = ssub.s32 %s16, 1
        // Predicated region
        $region13: #{tpu_custom_call.1} parent=11 // pred_check
          %p156 = pneg %p63
        $region14: #{tpu_custom_call.1} parent=11 // pred_check_branch
          %158 = sbr.rel (%p156) target = $region16
        $region15: #{tpu_custom_call.1} parent=11 // pred_region
          _
        $region16: #{tpu_custom_call.1} parent=11 // pred_fallthru
          _
      $region12: #{tpu_custom_call.1} parent=5 // pred_fallthru
        _
      %p159 = scmp.lt.s32.totalorder %s16, 2
      // Predicated region
      $region17: #{tpu_custom_call.1} parent=5 // pred_check
        %p160 = pneg %p159
      $region18: #{tpu_custom_call.1} parent=5 // pred_check_branch
        %162 = sbr.rel (%p160) target = $region20
      $region19: #{tpu_custom_call.1} parent=5 // pred_region
        // Predicated region
        $region21: #{tpu_custom_call.1} parent=19 // pred_check
          %p163 = pneg %p36
        $region22: #{tpu_custom_call.1} parent=19 // pred_check_branch
          %165 = sbr.rel (%p163) target = $region24
        $region23: #{tpu_custom_call.1} parent=19 // pred_region
          %s166 = sand.u32 %s26, 1
          %s167 = scalar_lea.sflag [#allocation3], %s166
          %s168 = sand.u32 %s26, 1
          %s169 = smul.addr %s168, 128
          %s170 = scalar_lea.vmem [#allocation2], %s169
          %s172 = ssub.s32 2048, 2048
          %173 = vsyncadd %s167, %s172
          %s174 = smul.addr %s16, 128
          %s175 = scalar_lea.hbm %s0, %s174
          %s176 = sshll.u32 %s170, 4
          %s177 = int_to_ptr.vmem [resolvable:$true] %s176
          %182 = dma.hbm_to_vmem [thread:$0]  %s175, 2048, %s177, %s167, 256, 128, 8
        $region24: #{tpu_custom_call.1} parent=19 // pred_fallthru
          _
        // Predicated region
        $region25: #{tpu_custom_call.1} parent=19 // pred_check
          %p183 = pneg %p83
        $region26: #{tpu_custom_call.1} parent=19 // pred_check_branch
          %185 = sbr.rel (%p183) target = $region28
        $region27: #{tpu_custom_call.1} parent=19 // pred_region
          %p186 = scmp.lt.s32.totalorder %s16, 1
          %s187 = scalar_select %p186, %s16, 1
          %s188 = smul.addr %s187, 4
          %s189 = scalar_lea.vmem %s2, %s188
        $region28: #{tpu_custom_call.1} parent=19 // pred_fallthru
          _
        // Predicated region
        $region29: #{tpu_custom_call.1} parent=19 // pred_check
          %p190 = pneg %p109
        $region30: #{tpu_custom_call.1} parent=19 // pred_check_branch
          %192 = sbr.rel (%p190) target = $region32
        $region31: #{tpu_custom_call.1} parent=19 // pred_region
          %p193 = scmp.lt.s32.totalorder %s16, 1
          %s194 = scalar_select %p193, %s16, 1
          %s195 = smul.addr %s194, 4
          %s196 = scalar_lea.vmem %s3, %s195
        $region32: #{tpu_custom_call.1} parent=19 // pred_fallthru
          _
      $region20: #{tpu_custom_call.1} parent=5 // pred_fallthru
        _
      %p197 = scmp.le.s32.totalorder 1, %s16
      %p198 = scmp.lt.s32.totalorder %s16, 3
      %p199 = pnand %p197, %p198
      %p200 = pneg %p199
      // Predicated region
      $region33: #{tpu_custom_call.1} parent=5 // pred_check
        _
      $region34: #{tpu_custom_call.1} parent=5 // pred_check_branch
        %202 = sbr.rel (%p199) target = $region36
      $region35: #{tpu_custom_call.1} parent=5 // pred_region
        %s203 = ssub.s32 %s16, 1
        %s204 = sand.u32 %s29, 1
        %s205 = scalar_lea.sflag [#allocation3], %s204
        %s206 = sand.u32 %s29, 1
        %s207 = smul.addr %s206, 128
        %s208 = scalar_lea.vmem [#allocation2], %s207
        // Predicated region
        $region37: #{tpu_custom_call.1} parent=35 // pred_check
          %p209 = pneg %p42
        $region38: #{tpu_custom_call.1} parent=35 // pred_check_branch
          %211 = sbr.rel (%p209) target = $region40
        $region39: #{tpu_custom_call.1} parent=35 // pred_region
          %212 = dma.done %s205, 2048
        $region40: #{tpu_custom_call.1} parent=35 // pred_fallthru
          _
        %s213 = sand.u32 %s29, 1
        %s214 = scalar_lea.sflag [#allocation3], %s213
        %s215 = sand.u32 %s29, 1
        %s216 = smul.addr %s215, 128
        %s217 = scalar_lea.vmem [#allocation2], %s216
        %p218 = pneg %p42
        %p219 = pneg %p39
        %p220 = pneg %p63
        %p221 = pneg %p60
        %p222 = scmp.lt.s32.totalorder %s21, 1
        %s223 = scalar_select %p222, %s21, 1
        %s224 = smul.addr %s223, 4
        %s225 = scalar_lea.vmem %s2, %s224
        %p226 = pneg %p89
        %p227 = pneg %p86
        %p228 = scmp.lt.s32.totalorder %s21, 1
        %s229 = scalar_select %p228, %s21, 1
        %s230 = smul.addr %s229, 4
        %s231 = scalar_lea.vmem %s3, %s230
        %p232 = pneg %p115
        %p233 = pneg %p112
        %p234 = pneg %p141
        %p235 = pneg %p138
        %s236 = sand.u32 %s128, 1
        %s237 = scalar_lea.sflag [#allocation4], %s236
        %s238 = sand.u32 %s128, 1
        %s239 = smul.addr %s238, 128
        %s240 = scalar_lea.vmem [#allocation5], %s239
        %p241 = scmp.lt.s32.totalorder %s21, 1
        %s242 = scalar_select %p241, %s21, 1
        %s243 = smul.addr %s242, 4
        %s244 = scalar_lea.vmem %s2, %s243
        %p245 = scmp.lt.s32.totalorder %s21, 1
        %s246 = scalar_select %p245, %s21, 1
        %s247 = smul.addr %s246, 4
        %s248 = scalar_lea.vmem %s3, %s247
        %v249 = vld [vmem:[%s208] sm:$0xff]
        %v250 = vld [vmem:[%s208 + $0x8] sm:$0xff]
        %v251 = vld [vmem:[%s208 + $0x10] sm:$0xff]
        %v252 = vld [vmem:[%s208 + $0x18] sm:$0xff]
        %v253 = vld [vmem:[%s208 + $0x20] sm:$0xff]
        %v254 = vld [vmem:[%s208 + $0x28] sm:$0xff]
        %v255 = vld [vmem:[%s208 + $0x30] sm:$0xff]
        %v256 = vld [vmem:[%s208 + $0x38] sm:$0xff]
        %v257 = vld [vmem:[%s208 + $0x40] sm:$0xff]
        %v258 = vld [vmem:[%s208 + $0x48] sm:$0xff]
        %v259 = vld [vmem:[%s208 + $0x50] sm:$0xff]
        %v260 = vld [vmem:[%s208 + $0x58] sm:$0xff]
        %v261 = vld [vmem:[%s208 + $0x60] sm:$0xff]
        %v262 = vld [vmem:[%s208 + $0x68] sm:$0xff]
        %v263 = vld [vmem:[%s208 + $0x70] sm:$0xff]
        %v264 = vld [vmem:[%s208 + $0x78] sm:$0xff]
        %v265 = vadd.f32 %v249, %v250
        %v266 = vadd.f32 %v265, %v251
        %v267 = vadd.f32 %v266, %v252
        %v268 = vadd.f32 %v267, %v253
        %v269 = vadd.f32 %v268, %v254
        %v270 = vadd.f32 %v269, %v255
        %v271 = vadd.f32 %v270, %v256
        %v272 = vadd.f32 %v271, %v257
        %v273 = vadd.f32 %v272, %v258
        %v274 = vadd.f32 %v273, %v259
        %v275 = vadd.f32 %v274, %v260
        %v276 = vadd.f32 %v275, %v261
        %v277 = vadd.f32 %v276, %v262
        %v278 = vadd.f32 %v277, %v263
        %v279 = vadd.f32 %v278, %v264
        %v280 = vrot.slane %v279, 4
        %v281 = vadd.f32 %v279, %v280
        %v282 = vrot.slane %v281, 2
        %v283 = vadd.f32 %v281, %v282
        %v284 = vrot.slane %v283, 1
        %v285 = vadd.f32 %v283, %v284
        %v286 = vmul.f32 %v249, %v249
        %v287 = vmul.f32 %v250, %v250
        %v288 = vmul.f32 %v251, %v251
        %v289 = vmul.f32 %v252, %v252
        %v290 = vmul.f32 %v253, %v253
        %v291 = vmul.f32 %v254, %v254
        %v292 = vmul.f32 %v255, %v255
        %v293 = vmul.f32 %v256, %v256
        %v294 = vmul.f32 %v257, %v257
        %v295 = vmul.f32 %v258, %v258
        %v296 = vmul.f32 %v259, %v259
        %v297 = vmul.f32 %v260, %v260
        %v298 = vmul.f32 %v261, %v261
        %v299 = vmul.f32 %v262, %v262
        %v300 = vmul.f32 %v263, %v263
        %v301 = vmul.f32 %v264, %v264
        %v302 = vadd.f32 %v286, %v287
        %v303 = vadd.f32 %v302, %v288
        %v304 = vadd.f32 %v303, %v289
        %v305 = vadd.f32 %v304, %v290
        %v306 = vadd.f32 %v305, %v291
        %v307 = vadd.f32 %v306, %v292
        %v308 = vadd.f32 %v307, %v293
        %v309 = vadd.f32 %v308, %v294
        %v310 = vadd.f32 %v309, %v295
        %v311 = vadd.f32 %v310, %v296
        %v312 = vadd.f32 %v311, %v297
        %v313 = vadd.f32 %v312, %v298
        %v314 = vadd.f32 %v313, %v299
        %v315 = vadd.f32 %v314, %v300
        %v316 = vadd.f32 %v315, %v301
        %v317 = vrot.slane %v316, 4
        %v318 = vadd.f32 %v316, %v317
        %v319 = vrot.slane %v318, 2
        %v320 = vadd.f32 %v318, %v319
        %v321 = vrot.slane %v320, 1
        %v322 = vadd.f32 %v320, %v321
        %v323 = vmul.f32 %v285, 0.0078125
        %v324 = vmul.f32 %v322, 0.0078125
        %v325 = vmul.f32 %v323, %v323
        %v326 = vsub.f32 %v324, %v325
        %v327 = vmax.f32 %v326, 0.0
        %v328 = vadd.f32 %v327, 1e-05
        %v329 = vrsqrt.pop %v328
        %v330 = vld [vmem:[%s1] sm:$0xf]
        %v331 = vld [vmem:[%s1 + $0x4] sm:$0xf]
        %v332 = vld [vmem:[%s1 + $0x8] sm:$0xf]
        %v333 = vld [vmem:[%s1 + $0xc] sm:$0xf]
        %v334 = vld [vmem:[%s1 + $0x10] sm:$0xf]
        %v335 = vld [vmem:[%s1 + $0x14] sm:$0xf]
        %v336 = vld [vmem:[%s1 + $0x18] sm:$0xf]
        %v337 = vld [vmem:[%s1 + $0x1c] sm:$0xf]
        %v338 = vld [vmem:[%s1 + $0x20] sm:$0xf]
        %v339 = vld [vmem:[%s1 + $0x24] sm:$0xf]
        %v340 = vld [vmem:[%s1 + $0x28] sm:$0xf]
        %v341 = vld [vmem:[%s1 + $0x2c] sm:$0xf]
        %v342 = vld [vmem:[%s1 + $0x30] sm:$0xf]
        %v343 = vld [vmem:[%s1 + $0x34] sm:$0xf]
        %v344 = vld [vmem:[%s1 + $0x38] sm:$0xf]
        %v345 = vld [vmem:[%s1 + $0x3c] sm:$0xf]
        %v346 = vunpack.c.l.bf16 %v330
        %v347 = vunpack.c.l.bf16 %v331
        %v348 = vunpack.c.l.bf16 %v332
        %v349 = vunpack.c.l.bf16 %v333
        %v350 = vunpack.c.l.bf16 %v334
        %v351 = vunpack.c.l.bf16 %v335
        %v352 = vunpack.c.l.bf16 %v336
        %v353 = vunpack.c.l.bf16 %v337
        %v354 = vunpack.c.l.bf16 %v338
        %v355 = vunpack.c.l.bf16 %v339
        %v356 = vunpack.c.l.bf16 %v340
        %v357 = vunpack.c.l.bf16 %v341
        %v358 = vunpack.c.l.bf16 %v342
        %v359 = vunpack.c.l.bf16 %v343
        %v360 = vunpack.c.l.bf16 %v344
        %v361 = vunpack.c.l.bf16 %v345
        %v362 = vld [vmem:[%s244] sm:$0xf]
        %v363 = vmul.f32 %v362, %v329
        %vm364 = vcmask 31744
        %v366 = vsel %vm364, %v346, 0
        %v369 = vsel %vm364, %v347, 0
        %v372 = vsel %vm364, %v348, 0
        %v375 = vsel %vm364, %v349, 0
        %v378 = vsel %vm364, %v350, 0
        %v381 = vsel %vm364, %v351, 0
        %v384 = vsel %vm364, %v352, 0
        %v387 = vsel %vm364, %v353, 0
        %v390 = vsel %vm364, %v354, 0
        %v393 = vsel %vm364, %v355, 0
        %v396 = vsel %vm364, %v356, 0
        %v399 = vsel %vm364, %v357, 0
        %v402 = vsel %vm364, %v358, 0
        %v405 = vsel %vm364, %v359, 0
        %v408 = vsel %vm364, %v360, 0
        %v411 = vsel %vm364, %v361, 0
        %vm413 = vcmask 1043456
        %v415 = vsel %vm413, %v363, 0
        %417 = vmatprep.subr.mxu0 0.0
        %v418 = vand.u32 %v415, 4294901760
        %419 = vmatpush1.msra.mxu0 %v418
        %420 = vmatprep.subr.mxu0 0.0
        %421 = vmatpush1.msra.mxu0 0.0
        %422 = vmatprep.subr.mxu0 0.0
        %423 = vmatpush1.msra.mxu0 0.0
        %424 = vmatprep.subr.mxu0 0.0
        %425 = vmatpush1.msra.mxu0 0.0
        %426 = vmatprep.subr.mxu0 0.0
        %427 = vmatpush1.msra.mxu0 0.0
        %428 = vmatprep.subr.mxu0 0.0
        %429 = vmatpush1.msra.mxu0 0.0
        %430 = vmatprep.subr.mxu0 0.0
        %431 = vmatpush1.msra.mxu0 0.0
        %432 = vmatprep.subr.mxu0 0.0
        %433 = vmatpush1.msra.mxu0 0.0
        %434 = vmatprep.subr.mxu0 0.0
        %435 = vmatpush1.msra.mxu0 0.0
        %436 = vmatprep.subr.mxu0 0.0
        %437 = vmatpush1.msra.mxu0 0.0
        %438 = vmatprep.subr.mxu0 0.0
        %439 = vmatpush1.msra.mxu0 0.0
        %440 = vmatprep.subr.mxu0 0.0
        %441 = vmatpush1.msra.mxu0 0.0
        %442 = vmatprep.subr.mxu0 0.0
        %443 = vmatpush1.msra.mxu0 0.0
        %444 = vmatprep.subr.mxu0 0.0
        %445 = vmatpush1.msra.mxu0 0.0
        %446 = vmatprep.subr.mxu0 0.0
        %447 = vmatpush1.msra.mxu0 0.0
        %448 = vmatprep.subr.mxu0 0.0
        %449 = vmatpush1.msra.mxu0 0.0
        %450 = vmatprep.subr.mxu0 0.0
        %451 = vmatpush1.msra.mxu0 0.0
        %452 = vmatprep.subr.mxu0 0.0
        %453 = vmatpush1.msra.mxu0 0.0
        %454 = vmatprep.subr.mxu0 0.0
        %455 = vmatpush1.msra.mxu0 0.0
        %456 = vmatprep.subr.mxu0 0.0
        %457 = vmatpush1.msra.mxu0 0.0
        %458 = vmatprep.subr.mxu0 0.0
        %459 = vmatpush1.msra.mxu0 0.0
        %460 = vmatprep.subr.mxu0 0.0
        %461 = vmatpush1.msra.mxu0 0.0
        %462 = vmatprep.subr.mxu0 0.0
        %463 = vmatpush1.msra.mxu0 0.0
        %464 = vmatprep.subr.mxu0 0.0
        %465 = vmatpush1.msra.mxu0 0.0
        %466 = vmatprep.subr.mxu0 0.0
        %467 = vmatpush1.msra.mxu0 0.0
        %468 = vmatprep.subr.mxu0 0.0
        %469 = vmatpush1.msra.mxu0 0.0
        %470 = vmatprep.subr.mxu0 0.0
        %471 = vmatpush1.msra.mxu0 0.0
        %472 = vmatprep.subr.mxu0 0.0
        %473 = vmatpush1.msra.mxu0 0.0
        %474 = vmatprep.subr.mxu0 0.0
        %475 = vmatpush1.msra.mxu0 0.0
        %476 = vmatprep.subr.mxu0 0.0
        %477 = vmatpush1.msra.mxu0 0.0
        %478 = vmatprep.subr.mxu0 0.0
        %479 = vmatpush1.msra.mxu0 0.0
        %480 = vmatprep.subr.mxu0 0.0
        %481 = vmatpush1.msra.mxu0 0.0
        %482 = vmatprep.mubr.f32.mxu0 0.0
        %v483 = vand.u32 %v366, 4294901760
        %v484 = vsub.f32 %v366, %v483
        %v485 = vand.u32 %v484, 4294901760
        %v486 = vsub.f32 %v484, %v485
        %v487 = vand.u32 %v486, 4294901760
        %488 = vmatmul.mubr.f32.gmra.mrb[0].mxu0 %v487
        %v489 = vpop.f32.mrb[0].mxu0
        %v490 = vadd.f32 0.0, %v489
        %v491 = vpop.f32.mrb[0].mxu0
        %492 = vmatprep.mubr.f32.mxu0 0.0
        %v493 = vand.u32 %v369, 4294901760
        %v494 = vsub.f32 %v369, %v493
        %v495 = vand.u32 %v494, 4294901760
        %v496 = vsub.f32 %v494, %v495
        %v497 = vand.u32 %v496, 4294901760
        %498 = vmatmul.mubr.f32.gmra.mrb[0].mxu0 %v497
        %v499 = vpop.f32.mrb[0].mxu0
        %v500 = vadd.f32 0.0, %v499
        %v501 = vpop.f32.mrb[0].mxu0
        %502 = vmatprep.mubr.f32.mxu0 0.0
        %v503 = vand.u32 %v372, 4294901760
        %v504 = vsub.f32 %v372, %v503
        %v505 = vand.u32 %v504, 4294901760
        %v506 = vsub.f32 %v504, %v505
        %v507 = vand.u32 %v506, 4294901760
        %508 = vmatmul.mubr.f32.gmra.mrb[0].mxu0 %v507
        %v509 = vpop.f32.mrb[0].mxu0
        %v510 = vadd.f32 0.0, %v509
        %v511 = vpop.f32.mrb[0].mxu0
        %512 = vmatprep.mubr.f32.mxu0 0.0
        %v513 = vand.u32 %v375, 4294901760
        %v514 = vsub.f32 %v375, %v513
        %v515 = vand.u32 %v514, 4294901760
        %v516 = vsub.f32 %v514, %v515
        %v517 = vand.u32 %v516, 4294901760
        %518 = vmatmul.mubr.f32.gmra.mrb[0].mxu0 %v517
        %v519 = vpop.f32.mrb[0].mxu0
        %v520 = vadd.f32 0.0, %v519
        %v521 = vpop.f32.mrb[0].mxu0
        %522 = vmatprep.mubr.f32.mxu0 0.0
        %v523 = vand.u32 %v378, 4294901760
        %v524 = vsub.f32 %v378, %v523
        %v525 = vand.u32 %v524, 4294901760
        %v526 = vsub.f32 %v524, %v525
        %v527 = vand.u32 %v526, 4294901760
        %528 = vmatmul.mubr.f32.gmra.mrb[0].mxu0 %v527
        %v529 = vpop.f32.mrb[0].mxu0
        %v530 = vadd.f32 0.0, %v529
        %v531 = vpop.f32.mrb[0].mxu0
        %532 = vmatprep.mubr.f32.mxu0 0.0
        %v533 = vand.u32 %v381, 4294901760
        %v534 = vsub.f32 %v381, %v533
        %v535 = vand.u32 %v534, 4294901760
        %v536 = vsub.f32 %v534, %v535
        %v537 = vand.u32 %v536, 4294901760
        %538 = vmatmul.mubr.f32.gmra.mrb[0].mxu0 %v537
        %v539 = vpop.f32.mrb[0].mxu0
        %v540 = vadd.f32 0.0, %v539
        %v541 = vpop.f32.mrb[0].mxu0
        %542 = vmatprep.mubr.f32.mxu0 0.0
        %v543 = vand.u32 %v384, 4294901760
        %v544 = vsub.f32 %v384, %v543
        %v545 = vand.u32 %v544, 4294901760
        %v546 = vsub.f32 %v544, %v545
        %v547 = vand.u32 %v546, 4294901760
        %548 = vmatmul.mubr.f32.gmra.mrb[0].mxu0 %v547
        %v549 = vpop.f32.mrb[0].mxu0
        %v550 = vadd.f32 0.0, %v549
        %v551 = vpop.f32.mrb[0].mxu0
        %552 = vmatprep.mubr.f32.mxu0 0.0
        %v553 = vand.u32 %v387, 4294901760
        %v554 = vsub.f32 %v387, %v553
        %v555 = vand.u32 %v554, 4294901760
        %v556 = vsub.f32 %v554, %v555
        %v557 = vand.u32 %v556, 4294901760
        %558 = vmatmul.mubr.f32.gmra.mrb[0].mxu0 %v557
        %v559 = vpop.f32.mrb[0].mxu0
        %v560 = vadd.f32 0.0, %v559
        %v561 = vpop.f32.mrb[0].mxu0
        %562 = vmatprep.mubr.f32.mxu0 0.0
        %v563 = vand.u32 %v390, 4294901760
        %v564 = vsub.f32 %v390, %v563
        %v565 = vand.u32 %v564, 4294901760
        %v566 = vsub.f32 %v564, %v565
        %v567 = vand.u32 %v566, 4294901760
        %568 = vmatmul.mubr.f32.gmra.mrb[0].mxu0 %v567
        %v569 = vpop.f32.mrb[0].mxu0
        %v570 = vadd.f32 0.0, %v569
        %v571 = vpop.f32.mrb[0].mxu0
        %572 = vmatprep.mubr.f32.mxu0 0.0
        %v573 = vand.u32 %v393, 4294901760
        %v574 = vsub.f32 %v393, %v573
        %v575 = vand.u32 %v574, 4294901760
        %v576 = vsub.f32 %v574, %v575
        %v577 = vand.u32 %v576, 4294901760
        %578 = vmatmul.mubr.f32.gmra.mrb[0].mxu0 %v577
        %v579 = vpop.f32.mrb[0].mxu0
        %v580 = vadd.f32 0.0, %v579
        %v581 = vpop.f32.mrb[0].mxu0
        %582 = vmatprep.mubr.f32.mxu0 0.0
        %v583 = vand.u32 %v396, 4294901760
        %v584 = vsub.f32 %v396, %v583
        %v585 = vand.u32 %v584, 4294901760
        %v586 = vsub.f32 %v584, %v585
        %v587 = vand.u32 %v586, 4294901760
        %588 = vmatmul.mubr.f32.gmra.mrb[0].mxu0 %v587
        %v589 = vpop.f32.mrb[0].mxu0
        %v590 = vadd.f32 0.0, %v589
        %v591 = vpop.f32.mrb[0].mxu0
        %592 = vmatprep.mubr.f32.mxu0 0.0
        %v593 = vand.u32 %v399, 4294901760
        %v594 = vsub.f32 %v399, %v593
        %v595 = vand.u32 %v594, 4294901760
        %v596 = vsub.f32 %v594, %v595
        %v597 = vand.u32 %v596, 4294901760
        %598 = vmatmul.mubr.f32.gmra.mrb[0].mxu0 %v597
        %v599 = vpop.f32.mrb[0].mxu0
        %v600 = vadd.f32 0.0, %v599
        %v601 = vpop.f32.mrb[0].mxu0
        %602 = vmatprep.mubr.f32.mxu0 0.0
        %v603 = vand.u32 %v402, 4294901760
        %v604 = vsub.f32 %v402, %v603
        %v605 = vand.u32 %v604, 4294901760
        %v606 = vsub.f32 %v604, %v605
        %v607 = vand.u32 %v606, 4294901760
        %608 = vmatmul.mubr.f32.gmra.mrb[0].mxu0 %v607
        %v609 = vpop.f32.mrb[0].mxu0
        %v610 = vadd.f32 0.0, %v609
        %v611 = vpop.f32.mrb[0].mxu0
        %612 = vmatprep.mubr.f32.mxu0 0.0
        %v613 = vand.u32 %v405, 4294901760
        %v614 = vsub.f32 %v405, %v613
        %v615 = vand.u32 %v614, 4294901760
        %v616 = vsub.f32 %v614, %v615
        %v617 = vand.u32 %v616, 4294901760
        %618 = vmatmul.mubr.f32.gmra.mrb[0].mxu0 %v617
        %v619 = vpop.f32.mrb[0].mxu0
        %v620 = vadd.f32 0.0, %v619
        %v621 = vpop.f32.mrb[0].mxu0
        %622 = vmatprep.mubr.f32.mxu0 0.0
        %v623 = vand.u32 %v408, 4294901760
        %v624 = vsub.f32 %v408, %v623
        %v625 = vand.u32 %v624, 4294901760
        %v626 = vsub.f32 %v624, %v625
        %v627 = vand.u32 %v626, 4294901760
        %628 = vmatmul.mubr.f32.gmra.mrb[0].mxu0 %v627
        %v629 = vpop.f32.mrb[0].mxu0
        %v630 = vadd.f32 0.0, %v629
        %v631 = vpop.f32.mrb[0].mxu0
        %632 = vmatprep.mubr.f32.mxu0 0.0
        %v633 = vand.u32 %v411, 4294901760
        %v634 = vsub.f32 %v411, %v633
        %v635 = vand.u32 %v634, 4294901760
        %v636 = vsub.f32 %v634, %v635
        %v637 = vand.u32 %v636, 4294901760
        %638 = vmatmul.mubr.f32.gmra.mrb[0].mxu0 %v637
        %v639 = vpop.f32.mrb[0].mxu0
        %v640 = vadd.f32 0.0, %v639
        %v641 = vpop.f32.mrb[0].mxu0
        %642 = vdwg.mxu0
        %643 = vmatprep.subr.mxu0 0.0
        %v644 = vand.u32 %v415, 4294901760
        %v645 = vsub.f32 %v415, %v644
        %v646 = vand.u32 %v645, 4294901760
        %v647 = vsub.f32 %v645, %v646
        %v648 = vand.u32 %v647, 4294901760
        %649 = vmatpush1.msra.mxu0 %v648
        %650 = vmatprep.subr.mxu0 0.0
        %651 = vmatpush1.msra.mxu0 0.0
        %652 = vmatprep.subr.mxu0 0.0
        %653 = vmatpush1.msra.mxu0 0.0
        %654 = vmatprep.subr.mxu0 0.0
        %655 = vmatpush1.msra.mxu0 0.0
        %656 = vmatprep.subr.mxu0 0.0
        %657 = vmatpush1.msra.mxu0 0.0
        %658 = vmatprep.subr.mxu0 0.0
        %659 = vmatpush1.msra.mxu0 0.0
        %660 = vmatprep.subr.mxu0 0.0
        %661 = vmatpush1.msra.mxu0 0.0
        %662 = vmatprep.subr.mxu0 0.0
        %663 = vmatpush1.msra.mxu0 0.0
        %664 = vmatprep.subr.mxu0 0.0
        %665 = vmatpush1.msra.mxu0 0.0
        %666 = vmatprep.subr.mxu0 0.0
        %667 = vmatpush1.msra.mxu0 0.0
        %668 = vmatprep.subr.mxu0 0.0
        %669 = vmatpush1.msra.mxu0 0.0
        %670 = vmatprep.subr.mxu0 0.0
        %671 = vmatpush1.msra.mxu0 0.0
        %672 = vmatprep.subr.mxu0 0.0
        %673 = vmatpush1.msra.mxu0 0.0
        %674 = vmatprep.subr.mxu0 0.0
        %675 = vmatpush1.msra.mxu0 0.0
        %676 = vmatprep.subr.mxu0 0.0
        %677 = vmatpush1.msra.mxu0 0.0
        %678 = vmatprep.subr.mxu0 0.0
        %679 = vmatpush1.msra.mxu0 0.0
        %680 = vmatprep.subr.mxu0 0.0
        %681 = vmatpush1.msra.mxu0 0.0
        %682 = vmatprep.subr.mxu0 0.0
        %683 = vmatpush1.msra.mxu0 0.0
        %684 = vmatprep.subr.mxu0 0.0
        %685 = vmatpush1.msra.mxu0 0.0
        %686 = vmatprep.subr.mxu0 0.0
        %687 = vmatpush1.msra.mxu0 0.0
        %688 = vmatprep.subr.mxu0 0.0
        %689 = vmatpush1.msra.mxu0 0.0
        %690 = vmatprep.subr.mxu0 0.0
        %691 = vmatpush1.msra.mxu0 0.0
        %692 = vmatprep.subr.mxu0 0.0
        %693 = vmatpush1.msra.mxu0 0.0
        %694 = vmatprep.subr.mxu0 0.0
        %695 = vmatpush1.msra.mxu0 0.0
        %696 = vmatprep.subr.mxu0 0.0
        %697 = vmatpush1.msra.mxu0 0.0
        %698 = vmatprep.subr.mxu0 0.0
        %699 = vmatpush1.msra.mxu0 0.0
        %700 = vmatprep.subr.mxu0 0.0
        %701 = vmatpush1.msra.mxu0 0.0
        %702 = vmatprep.subr.mxu0 0.0
        %703 = vmatpush1.msra.mxu0 0.0
        %704 = vmatprep.subr.mxu0 0.0
        %705 = vmatpush1.msra.mxu0 0.0
        %706 = vmatprep.subr.mxu0 0.0
        %707 = vmatpush1.msra.mxu0 0.0
        %708 = vmatprep.subr.mxu0 0.0
        %709 = vmatpush1.msra.mxu0 0.0
        %710 = vmatprep.subr.mxu0 0.0
        %711 = vmatpush1.msra.mxu0 0.0
        %712 = vmatprep.mubr.f32.mxu0 0.0
        %v713 = vand.u32 %v366, 4294901760
        %714 = vmatmul.mubr.f32.gmra.mrb[0].mxu0 %v713
        %v715 = vpop.f32.mrb[0].mxu0
        %v716 = vadd.f32 %v490, %v715
        %v717 = vpop.f32.mrb[0].mxu0
        %718 = vmatprep.mubr.f32.mxu0 0.0
        %v719 = vand.u32 %v369, 4294901760
        %720 = vmatmul.mubr.f32.gmra.mrb[0].mxu0 %v719
        %v721 = vpop.f32.mrb[0].mxu0
        %v722 = vadd.f32 %v500, %v721
        %v723 = vpop.f32.mrb[0].mxu0
        %724 = vmatprep.mubr.f32.mxu0 0.0
        %v725 = vand.u32 %v372, 4294901760
        %726 = vmatmul.mubr.f32.gmra.mrb[0].mxu0 %v725
        %v727 = vpop.f32.mrb[0].mxu0
        %v728 = vadd.f32 %v510, %v727
        %v729 = vpop.f32.mrb[0].mxu0
        %730 = vmatprep.mubr.f32.mxu0 0.0
        %v731 = vand.u32 %v375, 4294901760
        %732 = vmatmul.mubr.f32.gmra.mrb[0].mxu0 %v731
        %v733 = vpop.f32.mrb[0].mxu0
        %v734 = vadd.f32 %v520, %v733
        %v735 = vpop.f32.mrb[0].mxu0
        %736 = vmatprep.mubr.f32.mxu0 0.0
        %v737 = vand.u32 %v378, 4294901760
        %738 = vmatmul.mubr.f32.gmra.mrb[0].mxu0 %v737
        %v739 = vpop.f32.mrb[0].mxu0
        %v740 = vadd.f32 %v530, %v739
        %v741 = vpop.f32.mrb[0].mxu0
        %742 = vmatprep.mubr.f32.mxu0 0.0
        %v743 = vand.u32 %v381, 4294901760
        %744 = vmatmul.mubr.f32.gmra.mrb[0].mxu0 %v743
        %v745 = vpop.f32.mrb[0].mxu0
        %v746 = vadd.f32 %v540, %v745
        %v747 = vpop.f32.mrb[0].mxu0
        %748 = vmatprep.mubr.f32.mxu0 0.0
        %v749 = vand.u32 %v384, 4294901760
        %750 = vmatmul.mubr.f32.gmra.mrb[0].mxu0 %v749
        %v751 = vpop.f32.mrb[0].mxu0
        %v752 = vadd.f32 %v550, %v751
        %v753 = vpop.f32.mrb[0].mxu0
        %754 = vmatprep.mubr.f32.mxu0 0.0
        %v755 = vand.u32 %v387, 4294901760
        %756 = vmatmul.mubr.f32.gmra.mrb[0].mxu0 %v755
        %v757 = vpop.f32.mrb[0].mxu0
        %v758 = vadd.f32 %v560, %v757
        %v759 = vpop.f32.mrb[0].mxu0
        %760 = vmatprep.mubr.f32.mxu0 0.0
        %v761 = vand.u32 %v390, 4294901760
        %762 = vmatmul.mubr.f32.gmra.mrb[0].mxu0 %v761
        %v763 = vpop.f32.mrb[0].mxu0
        %v764 = vadd.f32 %v570, %v763
        %v765 = vpop.f32.mrb[0].mxu0
        %766 = vmatprep.mubr.f32.mxu0 0.0
        %v767 = vand.u32 %v393, 4294901760
        %768 = vmatmul.mubr.f32.gmra.mrb[0].mxu0 %v767
        %v769 = vpop.f32.mrb[0].mxu0
        %v770 = vadd.f32 %v580, %v769
        %v771 = vpop.f32.mrb[0].mxu0
        %772 = vmatprep.mubr.f32.mxu0 0.0
        %v773 = vand.u32 %v396, 4294901760
        %774 = vmatmul.mubr.f32.gmra.mrb[0].mxu0 %v773
        %v775 = vpop.f32.mrb[0].mxu0
        %v776 = vadd.f32 %v590, %v775
        %v777 = vpop.f32.mrb[0].mxu0
        %778 = vmatprep.mubr.f32.mxu0 0.0
        %v779 = vand.u32 %v399, 4294901760
        %780 = vmatmul.mubr.f32.gmra.mrb[0].mxu0 %v779
        %v781 = vpop.f32.mrb[0].mxu0
        %v782 = vadd.f32 %v600, %v781
        %v783 = vpop.f32.mrb[0].mxu0
        %784 = vmatprep.mubr.f32.mxu0 0.0
        %v785 = vand.u32 %v402, 4294901760
        %786 = vmatmul.mubr.f32.gmra.mrb[0].mxu0 %v785
        %v787 = vpop.f32.mrb[0].mxu0
        %v788 = vadd.f32 %v610, %v787
        %v789 = vpop.f32.mrb[0].mxu0
        %790 = vmatprep.mubr.f32.mxu0 0.0
        %v791 = vand.u32 %v405, 4294901760
        %792 = vmatmul.mubr.f32.gmra.mrb[0].mxu0 %v791
        %v793 = vpop.f32.mrb[0].mxu0
        %v794 = vadd.f32 %v620, %v793
        %v795 = vpop.f32.mrb[0].mxu0
        %796 = vmatprep.mubr.f32.mxu0 0.0
        %v797 = vand.u32 %v408, 4294901760
        %798 = vmatmul.mubr.f32.gmra.mrb[0].mxu0 %v797
        %v799 = vpop.f32.mrb[0].mxu0
        %v800 = vadd.f32 %v630, %v799
        %v801 = vpop.f32.mrb[0].mxu0
        %802 = vmatprep.mubr.f32.mxu0 0.0
        %v803 = vand.u32 %v411, 4294901760
        %804 = vmatmul.mubr.f32.gmra.mrb[0].mxu0 %v803
        %v805 = vpop.f32.mrb[0].mxu0
        %v806 = vadd.f32 %v640, %v805
        %v807 = vpop.f32.mrb[0].mxu0
        %808 = vdwg.mxu0
        %809 = vmatprep.subr.mxu0 0.0
        %v810 = vand.u32 %v415, 4294901760
        %v811 = vsub.f32 %v415, %v810
        %812 = vmatpush1.msra.mxu0 %v811
        %813 = vmatprep.subr.mxu0 0.0
        %814 = vmatpush1.msra.mxu0 0.0
        %815 = vmatprep.subr.mxu0 0.0
        %816 = vmatpush1.msra.mxu0 0.0
        %817 = vmatprep.subr.mxu0 0.0
        %818 = vmatpush1.msra.mxu0 0.0
        %819 = vmatprep.subr.mxu0 0.0
        %820 = vmatpush1.msra.mxu0 0.0
        %821 = vmatprep.subr.mxu0 0.0
        %822 = vmatpush1.msra.mxu0 0.0
        %823 = vmatprep.subr.mxu0 0.0
        %824 = vmatpush1.msra.mxu0 0.0
        %825 = vmatprep.subr.mxu0 0.0
        %826 = vmatpush1.msra.mxu0 0.0
        %827 = vmatprep.subr.mxu0 0.0
        %828 = vmatpush1.msra.mxu0 0.0
        %829 = vmatprep.subr.mxu0 0.0
        %830 = vmatpush1.msra.mxu0 0.0
        %831 = vmatprep.subr.mxu0 0.0
        %832 = vmatpush1.msra.mxu0 0.0
        %833 = vmatprep.subr.mxu0 0.0
        %834 = vmatpush1.msra.mxu0 0.0
        %835 = vmatprep.subr.mxu0 0.0
        %836 = vmatpush1.msra.mxu0 0.0
        %837 = vmatprep.subr.mxu0 0.0
        %838 = vmatpush1.msra.mxu0 0.0
        %839 = vmatprep.subr.mxu0 0.0
        %840 = vmatpush1.msra.mxu0 0.0
        %841 = vmatprep.subr.mxu0 0.0
        %842 = vmatpush1.msra.mxu0 0.0
        %843 = vmatprep.subr.mxu0 0.0
        %844 = vmatpush1.msra.mxu0 0.0
        %845 = vmatprep.subr.mxu0 0.0
        %846 = vmatpush1.msra.mxu0 0.0
        %847 = vmatprep.subr.mxu0 0.0
        %848 = vmatpush1.msra.mxu0 0.0
        %849 = vmatprep.subr.mxu0 0.0
        %850 = vmatpush1.msra.mxu0 0.0
        %851 = vmatprep.subr.mxu0 0.0
        %852 = vmatpush1.msra.mxu0 0.0
        %853 = vmatprep.subr.mxu0 0.0
        %854 = vmatpush1.msra.mxu0 0.0
        %855 = vmatprep.subr.mxu0 0.0
        %856 = vmatpush1.msra.mxu0 0.0
        %857 = vmatprep.subr.mxu0 0.0
        %858 = vmatpush1.msra.mxu0 0.0
        %859 = vmatprep.subr.mxu0 0.0
        %860 = vmatpush1.msra.mxu0 0.0
        %861 = vmatprep.subr.mxu0 0.0
        %862 = vmatpush1.msra.mxu0 0.0
        %863 = vmatprep.subr.mxu0 0.0
        %864 = vmatpush1.msra.mxu0 0.0
        %865 = vmatprep.subr.mxu0 0.0
        %866 = vmatpush1.msra.mxu0 0.0
        %867 = vmatprep.subr.mxu0 0.0
        %868 = vmatpush1.msra.mxu0 0.0
        %869 = vmatprep.subr.mxu0 0.0
        %870 = vmatpush1.msra.mxu0 0.0
        %871 = vmatprep.subr.mxu0 0.0
        %872 = vmatpush1.msra.mxu0 0.0
        %873 = vmatprep.subr.mxu0 0.0
        %874 = vmatpush1.msra.mxu0 0.0
        %875 = vmatprep.mubr.f32.mxu0 0.0
        %v876 = vand.u32 %v366, 4294901760
        %v877 = vsub.f32 %v366, %v876
        %878 = vmatmul.mubr.f32.gmra.mrb[0].mxu0 %v877
        %v879 = vpop.f32.mrb[0].mxu0
        %v880 = vadd.f32 %v716, %v879
        %v881 = vpop.f32.mrb[0].mxu0
        %882 = vmatprep.mubr.f32.mxu0 0.0
        %v883 = vand.u32 %v369, 4294901760
        %v884 = vsub.f32 %v369, %v883
        %885 = vmatmul.mubr.f32.gmra.mrb[0].mxu0 %v884
        %v886 = vpop.f32.mrb[0].mxu0
        %v887 = vadd.f32 %v722, %v886
        %v888 = vpop.f32.mrb[0].mxu0
        %889 = vmatprep.mubr.f32.mxu0 0.0
        %v890 = vand.u32 %v372, 4294901760
        %v891 = vsub.f32 %v372, %v890
        %892 = vmatmul.mubr.f32.gmra.mrb[0].mxu0 %v891
        %v893 = vpop.f32.mrb[0].mxu0
        %v894 = vadd.f32 %v728, %v893
        %v895 = vpop.f32.mrb[0].mxu0
        %896 = vmatprep.mubr.f32.mxu0 0.0
        %v897 = vand.u32 %v375, 4294901760
        %v898 = vsub.f32 %v375, %v897
        %899 = vmatmul.mubr.f32.gmra.mrb[0].mxu0 %v898
        %v900 = vpop.f32.mrb[0].mxu0
        %v901 = vadd.f32 %v734, %v900
        %v902 = vpop.f32.mrb[0].mxu0
        %903 = vmatprep.mubr.f32.mxu0 0.0
        %v904 = vand.u32 %v378, 4294901760
        %v905 = vsub.f32 %v378, %v904
        %906 = vmatmul.mubr.f32.gmra.mrb[0].mxu0 %v905
        %v907 = vpop.f32.mrb[0].mxu0
        %v908 = vadd.f32 %v740, %v907
        %v909 = vpop.f32.mrb[0].mxu0
        %910 = vmatprep.mubr.f32.mxu0 0.0
        %v911 = vand.u32 %v381, 4294901760
        %v912 = vsub.f32 %v381, %v911
        %913 = vmatmul.mubr.f32.gmra.mrb[0].mxu0 %v912
        %v914 = vpop.f32.mrb[0].mxu0
        %v915 = vadd.f32 %v746, %v914
        %v916 = vpop.f32.mrb[0].mxu0
        %917 = vmatprep.mubr.f32.mxu0 0.0
        %v918 = vand.u32 %v384, 4294901760
        %v919 = vsub.f32 %v384, %v918
        %920 = vmatmul.mubr.f32.gmra.mrb[0].mxu0 %v919
        %v921 = vpop.f32.mrb[0].mxu0
        %v922 = vadd.f32 %v752, %v921
        %v923 = vpop.f32.mrb[0].mxu0
        %924 = vmatprep.mubr.f32.mxu0 0.0
        %v925 = vand.u32 %v387, 4294901760
        %v926 = vsub.f32 %v387, %v925
        %927 = vmatmul.mubr.f32.gmra.mrb[0].mxu0 %v926
        %v928 = vpop.f32.mrb[0].mxu0
        %v929 = vadd.f32 %v758, %v928
        %v930 = vpop.f32.mrb[0].mxu0
        %931 = vmatprep.mubr.f32.mxu0 0.0
        %v932 = vand.u32 %v390, 4294901760
        %v933 = vsub.f32 %v390, %v932
        %934 = vmatmul.mubr.f32.gmra.mrb[0].mxu0 %v933
        %v935 = vpop.f32.mrb[0].mxu0
        %v936 = vadd.f32 %v764, %v935
        %v937 = vpop.f32.mrb[0].mxu0
        %938 = vmatprep.mubr.f32.mxu0 0.0
        %v939 = vand.u32 %v393, 4294901760
        %v940 = vsub.f32 %v393, %v939
        %941 = vmatmul.mubr.f32.gmra.mrb[0].mxu0 %v940
        %v942 = vpop.f32.mrb[0].mxu0
        %v943 = vadd.f32 %v770, %v942
        %v944 = vpop.f32.mrb[0].mxu0
        %945 = vmatprep.mubr.f32.mxu0 0.0
        %v946 = vand.u32 %v396, 4294901760
        %v947 = vsub.f32 %v396, %v946
        %948 = vmatmul.mubr.f32.gmra.mrb[0].mxu0 %v947
        %v949 = vpop.f32.mrb[0].mxu0
        %v950 = vadd.f32 %v776, %v949
        %v951 = vpop.f32.mrb[0].mxu0
        %952 = vmatprep.mubr.f32.mxu0 0.0
        %v953 = vand.u32 %v399, 4294901760
        %v954 = vsub.f32 %v399, %v953
        %955 = vmatmul.mubr.f32.gmra.mrb[0].mxu0 %v954
        %v956 = vpop.f32.mrb[0].mxu0
        %v957 = vadd.f32 %v782, %v956
        %v958 = vpop.f32.mrb[0].mxu0
        %959 = vmatprep.mubr.f32.mxu0 0.0
        %v960 = vand.u32 %v402, 4294901760
        %v961 = vsub.f32 %v402, %v960
        %962 = vmatmul.mubr.f32.gmra.mrb[0].mxu0 %v961
        %v963 = vpop.f32.mrb[0].mxu0
        %v964 = vadd.f32 %v788, %v963
        %v965 = vpop.f32.mrb[0].mxu0
        %966 = vmatprep.mubr.f32.mxu0 0.0
        %v967 = vand.u32 %v405, 4294901760
        %v968 = vsub.f32 %v405, %v967
        %969 = vmatmul.mubr.f32.gmra.mrb[0].mxu0 %v968
        %v970 = vpop.f32.mrb[0].mxu0
        %v971 = vadd.f32 %v794, %v970
        %v972 = vpop.f32.mrb[0].mxu0
        %973 = vmatprep.mubr.f32.mxu0 0.0
        %v974 = vand.u32 %v408, 4294901760
        %v975 = vsub.f32 %v408, %v974
        %976 = vmatmul.mubr.f32.gmra.mrb[0].mxu0 %v975
        %v977 = vpop.f32.mrb[0].mxu0
        %v978 = vadd.f32 %v800, %v977
        %v979 = vpop.f32.mrb[0].mxu0
        %980 = vmatprep.mubr.f32.mxu0 0.0
        %v981 = vand.u32 %v411, 4294901760
        %v982 = vsub.f32 %v411, %v981
        %983 = vmatmul.mubr.f32.gmra.mrb[0].mxu0 %v982
        %v984 = vpop.f32.mrb[0].mxu0
        %v985 = vadd.f32 %v806, %v984
        %v986 = vpop.f32.mrb[0].mxu0
        %987 = vdwg.mxu0
        %988 = vmatprep.subr.mxu0 0.0
        %v989 = vand.u32 %v415, 4294901760
        %990 = vmatpush1.msra.mxu0 %v989
        %991 = vmatprep.subr.mxu0 0.0
        %992 = vmatpush1.msra.mxu0 0.0
        %993 = vmatprep.subr.mxu0 0.0
        %994 = vmatpush1.msra.mxu0 0.0
        %995 = vmatprep.subr.mxu0 0.0
        %996 = vmatpush1.msra.mxu0 0.0
        %997 = vmatprep.subr.mxu0 0.0
        %998 = vmatpush1.msra.mxu0 0.0
        %999 = vmatprep.subr.mxu0 0.0
        %1000 = vmatpush1.msra.mxu0 0.0
        %1001 = vmatprep.subr.mxu0 0.0
        %1002 = vmatpush1.msra.mxu0 0.0
        %1003 = vmatprep.subr.mxu0 0.0
        %1004 = vmatpush1.msra.mxu0 0.0
        %1005 = vmatprep.subr.mxu0 0.0
        %1006 = vmatpush1.msra.mxu0 0.0
        %1007 = vmatprep.subr.mxu0 0.0
        %1008 = vmatpush1.msra.mxu0 0.0
        %1009 = vmatprep.subr.mxu0 0.0
        %1010 = vmatpush1.msra.mxu0 0.0
        %1011 = vmatprep.subr.mxu0 0.0
        %1012 = vmatpush1.msra.mxu0 0.0
        %1013 = vmatprep.subr.mxu0 0.0
        %1014 = vmatpush1.msra.mxu0 0.0
        %1015 = vmatprep.subr.mxu0 0.0
        %1016 = vmatpush1.msra.mxu0 0.0
        %1017 = vmatprep.subr.mxu0 0.0
        %1018 = vmatpush1.msra.mxu0 0.0
        %1019 = vmatprep.subr.mxu0 0.0
        %1020 = vmatpush1.msra.mxu0 0.0
        %1021 = vmatprep.subr.mxu0 0.0
        %1022 = vmatpush1.msra.mxu0 0.0
        %1023 = vmatprep.subr.mxu0 0.0
        %1024 = vmatpush1.msra.mxu0 0.0
        %1025 = vmatprep.subr.mxu0 0.0
        %1026 = vmatpush1.msra.mxu0 0.0
        %1027 = vmatprep.subr.mxu0 0.0
        %1028 = vmatpush1.msra.mxu0 0.0
        %1029 = vmatprep.subr.mxu0 0.0
        %1030 = vmatpush1.msra.mxu0 0.0
        %1031 = vmatprep.subr.mxu0 0.0
        %1032 = vmatpush1.msra.mxu0 0.0
        %1033 = vmatprep.subr.mxu0 0.0
        %1034 = vmatpush1.msra.mxu0 0.0
        %1035 = vmatprep.subr.mxu0 0.0
        %1036 = vmatpush1.msra.mxu0 0.0
        %1037 = vmatprep.subr.mxu0 0.0
        %1038 = vmatpush1.msra.mxu0 0.0
        %1039 = vmatprep.subr.mxu0 0.0
        %1040 = vmatpush1.msra.mxu0 0.0
        %1041 = vmatprep.subr.mxu0 0.0
        %1042 = vmatpush1.msra.mxu0 0.0
        %1043 = vmatprep.subr.mxu0 0.0
        %1044 = vmatpush1.msra.mxu0 0.0
        %1045 = vmatprep.subr.mxu0 0.0
        %1046 = vmatpush1.msra.mxu0 0.0
        %1047 = vmatprep.subr.mxu0 0.0
        %1048 = vmatpush1.msra.mxu0 0.0
        %1049 = vmatprep.subr.mxu0 0.0
        %1050 = vmatpush1.msra.mxu0 0.0
        %1051 = vmatprep.subr.mxu0 0.0
        %1052 = vmatpush1.msra.mxu0 0.0
        %1053 = vmatprep.mubr.f32.mxu0 0.0
        %v1054 = vand.u32 %v366, 4294901760
        %v1055 = vsub.f32 %v366, %v1054
        %v1056 = vand.u32 %v1055, 4294901760
        %1057 = vmatmul.mubr.f32.gmra.mrb[0].mxu0 %v1056
        %v1058 = vpop.f32.mrb[0].mxu0
        %v1059 = vadd.f32 %v880, %v1058
        %v1060 = vpop.f32.mrb[0].mxu0
        %1061 = vmatprep.mubr.f32.mxu0 0.0
        %v1062 = vand.u32 %v369, 4294901760
        %v1063 = vsub.f32 %v369, %v1062
        %v1064 = vand.u32 %v1063, 4294901760
        %1065 = vmatmul.mubr.f32.gmra.mrb[0].mxu0 %v1064
        %v1066 = vpop.f32.mrb[0].mxu0
        %v1067 = vadd.f32 %v887, %v1066
        %v1068 = vpop.f32.mrb[0].mxu0
        %1069 = vmatprep.mubr.f32.mxu0 0.0
        %v1070 = vand.u32 %v372, 4294901760
        %v1071 = vsub.f32 %v372, %v1070
        %v1072 = vand.u32 %v1071, 4294901760
        %1073 = vmatmul.mubr.f32.gmra.mrb[0].mxu0 %v1072
        %v1074 = vpop.f32.mrb[0].mxu0
        %v1075 = vadd.f32 %v894, %v1074
        %v1076 = vpop.f32.mrb[0].mxu0
        %1077 = vmatprep.mubr.f32.mxu0 0.0
        %v1078 = vand.u32 %v375, 4294901760
        %v1079 = vsub.f32 %v375, %v1078
        %v1080 = vand.u32 %v1079, 4294901760
        %1081 = vmatmul.mubr.f32.gmra.mrb[0].mxu0 %v1080
        %v1082 = vpop.f32.mrb[0].mxu0
        %v1083 = vadd.f32 %v901, %v1082
        %v1084 = vpop.f32.mrb[0].mxu0
        %1085 = vmatprep.mubr.f32.mxu0 0.0
        %v1086 = vand.u32 %v378, 4294901760
        %v1087 = vsub.f32 %v378, %v1086
        %v1088 = vand.u32 %v1087, 4294901760
        %1089 = vmatmul.mubr.f32.gmra.mrb[0].mxu0 %v1088
        %v1090 = vpop.f32.mrb[0].mxu0
        %v1091 = vadd.f32 %v908, %v1090
        %v1092 = vpop.f32.mrb[0].mxu0
        %1093 = vmatprep.mubr.f32.mxu0 0.0
        %v1094 = vand.u32 %v381, 4294901760
        %v1095 = vsub.f32 %v381, %v1094
        %v1096 = vand.u32 %v1095, 4294901760
        %1097 = vmatmul.mubr.f32.gmra.mrb[0].mxu0 %v1096
        %v1098 = vpop.f32.mrb[0].mxu0
        %v1099 = vadd.f32 %v915, %v1098
        %v1100 = vpop.f32.mrb[0].mxu0
        %1101 = vmatprep.mubr.f32.mxu0 0.0
        %v1102 = vand.u32 %v384, 4294901760
        %v1103 = vsub.f32 %v384, %v1102
        %v1104 = vand.u32 %v1103, 4294901760
        %1105 = vmatmul.mubr.f32.gmra.mrb[0].mxu0 %v1104
        %v1106 = vpop.f32.mrb[0].mxu0
        %v1107 = vadd.f32 %v922, %v1106
        %v1108 = vpop.f32.mrb[0].mxu0
        %1109 = vmatprep.mubr.f32.mxu0 0.0
        %v1110 = vand.u32 %v387, 4294901760
        %v1111 = vsub.f32 %v387, %v1110
        %v1112 = vand.u32 %v1111, 4294901760
        %1113 = vmatmul.mubr.f32.gmra.mrb[0].mxu0 %v1112
        %v1114 = vpop.f32.mrb[0].mxu0
        %v1115 = vadd.f32 %v929, %v1114
        %v1116 = vpop.f32.mrb[0].mxu0
        %1117 = vmatprep.mubr.f32.mxu0 0.0
        %v1118 = vand.u32 %v390, 4294901760
        %v1119 = vsub.f32 %v390, %v1118
        %v1120 = vand.u32 %v1119, 4294901760
        %1121 = vmatmul.mubr.f32.gmra.mrb[0].mxu0 %v1120
        %v1122 = vpop.f32.mrb[0].mxu0
        %v1123 = vadd.f32 %v936, %v1122
        %v1124 = vpop.f32.mrb[0].mxu0
        %1125 = vmatprep.mubr.f32.mxu0 0.0
        %v1126 = vand.u32 %v393, 4294901760
        %v1127 = vsub.f32 %v393, %v1126
        %v1128 = vand.u32 %v1127, 4294901760
        %1129 = vmatmul.mubr.f32.gmra.mrb[0].mxu0 %v1128
        %v1130 = vpop.f32.mrb[0].mxu0
        %v1131 = vadd.f32 %v943, %v1130
        %v1132 = vpop.f32.mrb[0].mxu0
        %1133 = vmatprep.mubr.f32.mxu0 0.0
        %v1134 = vand.u32 %v396, 4294901760
        %v1135 = vsub.f32 %v396, %v1134
        %v1136 = vand.u32 %v1135, 4294901760
        %1137 = vmatmul.mubr.f32.gmra.mrb[0].mxu0 %v1136
        %v1138 = vpop.f32.mrb[0].mxu0
        %v1139 = vadd.f32 %v950, %v1138
        %v1140 = vpop.f32.mrb[0].mxu0
        %1141 = vmatprep.mubr.f32.mxu0 0.0
        %v1142 = vand.u32 %v399, 4294901760
        %v1143 = vsub.f32 %v399, %v1142
        %v1144 = vand.u32 %v1143, 4294901760
        %1145 = vmatmul.mubr.f32.gmra.mrb[0].mxu0 %v1144
        %v1146 = vpop.f32.mrb[0].mxu0
        %v1147 = vadd.f32 %v957, %v1146
        %v1148 = vpop.f32.mrb[0].mxu0
        %1149 = vmatprep.mubr.f32.mxu0 0.0
        %v1150 = vand.u32 %v402, 4294901760
        %v1151 = vsub.f32 %v402, %v1150
        %v1152 = vand.u32 %v1151, 4294901760
        %1153 = vmatmul.mubr.f32.gmra.mrb[0].mxu0 %v1152
        %v1154 = vpop.f32.mrb[0].mxu0
        %v1155 = vadd.f32 %v964, %v1154
        %v1156 = vpop.f32.mrb[0].mxu0
        %1157 = vmatprep.mubr.f32.mxu0 0.0
        %v1158 = vand.u32 %v405, 4294901760
        %v1159 = vsub.f32 %v405, %v1158
        %v1160 = vand.u32 %v1159, 4294901760
        %1161 = vmatmul.mubr.f32.gmra.mrb[0].mxu0 %v1160
        %v1162 = vpop.f32.mrb[0].mxu0
        %v1163 = vadd.f32 %v971, %v1162
        %v1164 = vpop.f32.mrb[0].mxu0
        %1165 = vmatprep.mubr.f32.mxu0 0.0
        %v1166 = vand.u32 %v408, 4294901760
        %v1167 = vsub.f32 %v408, %v1166
        %v1168 = vand.u32 %v1167, 4294901760
        %1169 = vmatmul.mubr.f32.gmra.mrb[0].mxu0 %v1168
        %v1170 = vpop.f32.mrb[0].mxu0
        %v1171 = vadd.f32 %v978, %v1170
        %v1172 = vpop.f32.mrb[0].mxu0
        %1173 = vmatprep.mubr.f32.mxu0 0.0
        %v1174 = vand.u32 %v411, 4294901760
        %v1175 = vsub.f32 %v411, %v1174
        %v1176 = vand.u32 %v1175, 4294901760
        %1177 = vmatmul.mubr.f32.gmra.mrb[0].mxu0 %v1176
        %v1178 = vpop.f32.mrb[0].mxu0
        %v1179 = vadd.f32 %v985, %v1178
        %v1180 = vpop.f32.mrb[0].mxu0
        %1181 = vdwg.mxu0
        %1182 = vmatprep.subr.mxu0 0.0
        %v1183 = vand.u32 %v415, 4294901760
        %v1184 = vsub.f32 %v415, %v1183
        %v1185 = vand.u32 %v1184, 4294901760
        %1186 = vmatpush1.msra.mxu0 %v1185
        %1187 = vmatprep.subr.mxu0 0.0
        %1188 = vmatpush1.msra.mxu0 0.0
        %1189 = vmatprep.subr.mxu0 0.0
        %1190 = vmatpush1.msra.mxu0 0.0
        %1191 = vmatprep.subr.mxu0 0.0
        %1192 = vmatpush1.msra.mxu0 0.0
        %1193 = vmatprep.subr.mxu0 0.0
        %1194 = vmatpush1.msra.mxu0 0.0
        %1195 = vmatprep.subr.mxu0 0.0
        %1196 = vmatpush1.msra.mxu0 0.0
        %1197 = vmatprep.subr.mxu0 0.0
        %1198 = vmatpush1.msra.mxu0 0.0
        %1199 = vmatprep.subr.mxu0 0.0
        %1200 = vmatpush1.msra.mxu0 0.0
        %1201 = vmatprep.subr.mxu0 0.0
        %1202 = vmatpush1.msra.mxu0 0.0
        %1203 = vmatprep.subr.mxu0 0.0
        %1204 = vmatpush1.msra.mxu0 0.0
        %1205 = vmatprep.subr.mxu0 0.0
        %1206 = vmatpush1.msra.mxu0 0.0
        %1207 = vmatprep.subr.mxu0 0.0
        %1208 = vmatpush1.msra.mxu0 0.0
        %1209 = vmatprep.subr.mxu0 0.0
        %1210 = vmatpush1.msra.mxu0 0.0
        %1211 = vmatprep.subr.mxu0 0.0
        %1212 = vmatpush1.msra.mxu0 0.0
        %1213 = vmatprep.subr.mxu0 0.0
        %1214 = vmatpush1.msra.mxu0 0.0
        %1215 = vmatprep.subr.mxu0 0.0
        %1216 = vmatpush1.msra.mxu0 0.0
        %1217 = vmatprep.subr.mxu0 0.0
        %1218 = vmatpush1.msra.mxu0 0.0
        %1219 = vmatprep.subr.mxu0 0.0
        %1220 = vmatpush1.msra.mxu0 0.0
        %1221 = vmatprep.subr.mxu0 0.0
        %1222 = vmatpush1.msra.mxu0 0.0
        %1223 = vmatprep.subr.mxu0 0.0
        %1224 = vmatpush1.msra.mxu0 0.0
        %1225 = vmatprep.subr.mxu0 0.0
        %1226 = vmatpush1.msra.mxu0 0.0
        %1227 = vmatprep.subr.mxu0 0.0
        %1228 = vmatpush1.msra.mxu0 0.0
        %1229 = vmatprep.subr.mxu0 0.0
        %1230 = vmatpush1.msra.mxu0 0.0
        %1231 = vmatprep.subr.mxu0 0.0
        %1232 = vmatpush1.msra.mxu0 0.0
        %1233 = vmatprep.subr.mxu0 0.0
        %1234 = vmatpush1.msra.mxu0 0.0
        %1235 = vmatprep.subr.mxu0 0.0
        %1236 = vmatpush1.msra.mxu0 0.0
        %1237 = vmatprep.subr.mxu0 0.0
        %1238 = vmatpush1.msra.mxu0 0.0
        %1239 = vmatprep.subr.mxu0 0.0
        %1240 = vmatpush1.msra.mxu0 0.0
        %1241 = vmatprep.subr.mxu0 0.0
        %1242 = vmatpush1.msra.mxu0 0.0
        %1243 = vmatprep.subr.mxu0 0.0
        %1244 = vmatpush1.msra.mxu0 0.0
        %1245 = vmatprep.subr.mxu0 0.0
        %1246 = vmatpush1.msra.mxu0 0.0
        %1247 = vmatprep.subr.mxu0 0.0
        %1248 = vmatpush1.msra.mxu0 0.0
        %1249 = vmatprep.mubr.f32.mxu0 0.0
        %v1250 = vand.u32 %v366, 4294901760
        %1251 = vmatmul.mubr.f32.gmra.mrb[0].mxu0 %v1250
        %v1252 = vpop.f32.mrb[0].mxu0
        %v1253 = vadd.f32 %v1059, %v1252
        %v1254 = vpop.f32.mrb[0].mxu0
        %1255 = vmatprep.mubr.f32.mxu0 0.0
        %v1256 = vand.u32 %v369, 4294901760
        %1257 = vmatmul.mubr.f32.gmra.mrb[0].mxu0 %v1256
        %v1258 = vpop.f32.mrb[0].mxu0
        %v1259 = vadd.f32 %v1067, %v1258
        %v1260 = vpop.f32.mrb[0].mxu0
        %1261 = vmatprep.mubr.f32.mxu0 0.0
        %v1262 = vand.u32 %v372, 4294901760
        %1263 = vmatmul.mubr.f32.gmra.mrb[0].mxu0 %v1262
        %v1264 = vpop.f32.mrb[0].mxu0
        %v1265 = vadd.f32 %v1075, %v1264
        %v1266 = vpop.f32.mrb[0].mxu0
        %1267 = vmatprep.mubr.f32.mxu0 0.0
        %v1268 = vand.u32 %v375, 4294901760
        %1269 = vmatmul.mubr.f32.gmra.mrb[0].mxu0 %v1268
        %v1270 = vpop.f32.mrb[0].mxu0
        %v1271 = vadd.f32 %v1083, %v1270
        %v1272 = vpop.f32.mrb[0].mxu0
        %1273 = vmatprep.mubr.f32.mxu0 0.0
        %v1274 = vand.u32 %v378, 4294901760
        %1275 = vmatmul.mubr.f32.gmra.mrb[0].mxu0 %v1274
        %v1276 = vpop.f32.mrb[0].mxu0
        %v1277 = vadd.f32 %v1091, %v1276
        %v1278 = vpop.f32.mrb[0].mxu0
        %1279 = vmatprep.mubr.f32.mxu0 0.0
        %v1280 = vand.u32 %v381, 4294901760
        %1281 = vmatmul.mubr.f32.gmra.mrb[0].mxu0 %v1280
        %v1282 = vpop.f32.mrb[0].mxu0
        %v1283 = vadd.f32 %v1099, %v1282
        %v1284 = vpop.f32.mrb[0].mxu0
        %1285 = vmatprep.mubr.f32.mxu0 0.0
        %v1286 = vand.u32 %v384, 4294901760
        %1287 = vmatmul.mubr.f32.gmra.mrb[0].mxu0 %v1286
        %v1288 = vpop.f32.mrb[0].mxu0
        %v1289 = vadd.f32 %v1107, %v1288
        %v1290 = vpop.f32.mrb[0].mxu0
        %1291 = vmatprep.mubr.f32.mxu0 0.0
        %v1292 = vand.u32 %v387, 4294901760
        %1293 = vmatmul.mubr.f32.gmra.mrb[0].mxu0 %v1292
        %v1294 = vpop.f32.mrb[0].mxu0
        %v1295 = vadd.f32 %v1115, %v1294
        %v1296 = vpop.f32.mrb[0].mxu0
        %1297 = vmatprep.mubr.f32.mxu0 0.0
        %v1298 = vand.u32 %v390, 4294901760
        %1299 = vmatmul.mubr.f32.gmra.mrb[0].mxu0 %v1298
        %v1300 = vpop.f32.mrb[0].mxu0
        %v1301 = vadd.f32 %v1123, %v1300
        %v1302 = vpop.f32.mrb[0].mxu0
        %1303 = vmatprep.mubr.f32.mxu0 0.0
        %v1304 = vand.u32 %v393, 4294901760
        %1305 = vmatmul.mubr.f32.gmra.mrb[0].mxu0 %v1304
        %v1306 = vpop.f32.mrb[0].mxu0
        %v1307 = vadd.f32 %v1131, %v1306
        %v1308 = vpop.f32.mrb[0].mxu0
        %1309 = vmatprep.mubr.f32.mxu0 0.0
        %v1310 = vand.u32 %v396, 4294901760
        %1311 = vmatmul.mubr.f32.gmra.mrb[0].mxu0 %v1310
        %v1312 = vpop.f32.mrb[0].mxu0
        %v1313 = vadd.f32 %v1139, %v1312
        %v1314 = vpop.f32.mrb[0].mxu0
        %1315 = vmatprep.mubr.f32.mxu0 0.0
        %v1316 = vand.u32 %v399, 4294901760
        %1317 = vmatmul.mubr.f32.gmra.mrb[0].mxu0 %v1316
        %v1318 = vpop.f32.mrb[0].mxu0
        %v1319 = vadd.f32 %v1147, %v1318
        %v1320 = vpop.f32.mrb[0].mxu0
        %1321 = vmatprep.mubr.f32.mxu0 0.0
        %v1322 = vand.u32 %v402, 4294901760
        %1323 = vmatmul.mubr.f32.gmra.mrb[0].mxu0 %v1322
        %v1324 = vpop.f32.mrb[0].mxu0
        %v1325 = vadd.f32 %v1155, %v1324
        %v1326 = vpop.f32.mrb[0].mxu0
        %1327 = vmatprep.mubr.f32.mxu0 0.0
        %v1328 = vand.u32 %v405, 4294901760
        %1329 = vmatmul.mubr.f32.gmra.mrb[0].mxu0 %v1328
        %v1330 = vpop.f32.mrb[0].mxu0
        %v1331 = vadd.f32 %v1163, %v1330
        %v1332 = vpop.f32.mrb[0].mxu0
        %1333 = vmatprep.mubr.f32.mxu0 0.0
        %v1334 = vand.u32 %v408, 4294901760
        %1335 = vmatmul.mubr.f32.gmra.mrb[0].mxu0 %v1334
        %v1336 = vpop.f32.mrb[0].mxu0
        %v1337 = vadd.f32 %v1171, %v1336
        %v1338 = vpop.f32.mrb[0].mxu0
        %1339 = vmatprep.mubr.f32.mxu0 0.0
        %v1340 = vand.u32 %v411, 4294901760
        %1341 = vmatmul.mubr.f32.gmra.mrb[0].mxu0 %v1340
        %v1342 = vpop.f32.mrb[0].mxu0
        %v1343 = vadd.f32 %v1179, %v1342
        %v1344 = vpop.f32.mrb[0].mxu0
        %1345 = vdwg.mxu0
        %1346 = vmatprep.subr.mxu0 0.0
        %v1347 = vand.u32 %v415, 4294901760
        %1348 = vmatpush1.msra.mxu0 %v1347
        %1349 = vmatprep.subr.mxu0 0.0
        %1350 = vmatpush1.msra.mxu0 0.0
        %1351 = vmatprep.subr.mxu0 0.0
        %1352 = vmatpush1.msra.mxu0 0.0
        %1353 = vmatprep.subr.mxu0 0.0
        %1354 = vmatpush1.msra.mxu0 0.0
        %1355 = vmatprep.subr.mxu0 0.0
        %1356 = vmatpush1.msra.mxu0 0.0
        %1357 = vmatprep.subr.mxu0 0.0
        %1358 = vmatpush1.msra.mxu0 0.0
        %1359 = vmatprep.subr.mxu0 0.0
        %1360 = vmatpush1.msra.mxu0 0.0
        %1361 = vmatprep.subr.mxu0 0.0
        %1362 = vmatpush1.msra.mxu0 0.0
        %1363 = vmatprep.subr.mxu0 0.0
        %1364 = vmatpush1.msra.mxu0 0.0
        %1365 = vmatprep.subr.mxu0 0.0
        %1366 = vmatpush1.msra.mxu0 0.0
        %1367 = vmatprep.subr.mxu0 0.0
        %1368 = vmatpush1.msra.mxu0 0.0
        %1369 = vmatprep.subr.mxu0 0.0
        %1370 = vmatpush1.msra.mxu0 0.0
        %1371 = vmatprep.subr.mxu0 0.0
        %1372 = vmatpush1.msra.mxu0 0.0
        %1373 = vmatprep.subr.mxu0 0.0
        %1374 = vmatpush1.msra.mxu0 0.0
        %1375 = vmatprep.subr.mxu0 0.0
        %1376 = vmatpush1.msra.mxu0 0.0
        %1377 = vmatprep.subr.mxu0 0.0
        %1378 = vmatpush1.msra.mxu0 0.0
        %1379 = vmatprep.subr.mxu0 0.0
        %1380 = vmatpush1.msra.mxu0 0.0
        %1381 = vmatprep.subr.mxu0 0.0
        %1382 = vmatpush1.msra.mxu0 0.0
        %1383 = vmatprep.subr.mxu0 0.0
        %1384 = vmatpush1.msra.mxu0 0.0
        %1385 = vmatprep.subr.mxu0 0.0
        %1386 = vmatpush1.msra.mxu0 0.0
        %1387 = vmatprep.subr.mxu0 0.0
        %1388 = vmatpush1.msra.mxu0 0.0
        %1389 = vmatprep.subr.mxu0 0.0
        %1390 = vmatpush1.msra.mxu0 0.0
        %1391 = vmatprep.subr.mxu0 0.0
        %1392 = vmatpush1.msra.mxu0 0.0
        %1393 = vmatprep.subr.mxu0 0.0
        %1394 = vmatpush1.msra.mxu0 0.0
        %1395 = vmatprep.subr.mxu0 0.0
        %1396 = vmatpush1.msra.mxu0 0.0
        %1397 = vmatprep.subr.mxu0 0.0
        %1398 = vmatpush1.msra.mxu0 0.0
        %1399 = vmatprep.subr.mxu0 0.0
        %1400 = vmatpush1.msra.mxu0 0.0
        %1401 = vmatprep.subr.mxu0 0.0
        %1402 = vmatpush1.msra.mxu0 0.0
        %1403 = vmatprep.subr.mxu0 0.0
        %1404 = vmatpush1.msra.mxu0 0.0
        %1405 = vmatprep.subr.mxu0 0.0
        %1406 = vmatpush1.msra.mxu0 0.0
        %1407 = vmatprep.subr.mxu0 0.0
        %1408 = vmatpush1.msra.mxu0 0.0
        %1409 = vmatprep.subr.mxu0 0.0
        %1410 = vmatpush1.msra.mxu0 0.0
        %1411 = vmatprep.mubr.f32.mxu0 0.0
        %v1412 = vand.u32 %v366, 4294901760
        %1413 = vmatmul.mubr.f32.gmra.mrb[0].mxu0 %v1412
        %v1414 = vpop.f32.mrb[0].mxu0
        %v1415 = vadd.f32 %v1253, %v1414
        %v1416 = vpop.f32.mrb[0].mxu0
        %1417 = vmatprep.mubr.f32.mxu0 0.0
        %v1418 = vand.u32 %v369, 4294901760
        %1419 = vmatmul.mubr.f32.gmra.mrb[0].mxu0 %v1418
        %v1420 = vpop.f32.mrb[0].mxu0
        %v1421 = vadd.f32 %v1259, %v1420
        %v1422 = vpop.f32.mrb[0].mxu0
        %1423 = vmatprep.mubr.f32.mxu0 0.0
        %v1424 = vand.u32 %v372, 4294901760
        %1425 = vmatmul.mubr.f32.gmra.mrb[0].mxu0 %v1424
        %v1426 = vpop.f32.mrb[0].mxu0
        %v1427 = vadd.f32 %v1265, %v1426
        %v1428 = vpop.f32.mrb[0].mxu0
        %1429 = vmatprep.mubr.f32.mxu0 0.0
        %v1430 = vand.u32 %v375, 4294901760
        %1431 = vmatmul.mubr.f32.gmra.mrb[0].mxu0 %v1430
        %v1432 = vpop.f32.mrb[0].mxu0
        %v1433 = vadd.f32 %v1271, %v1432
        %v1434 = vpop.f32.mrb[0].mxu0
        %1435 = vmatprep.mubr.f32.mxu0 0.0
        %v1436 = vand.u32 %v378, 4294901760
        %1437 = vmatmul.mubr.f32.gmra.mrb[0].mxu0 %v1436
        %v1438 = vpop.f32.mrb[0].mxu0
        %v1439 = vadd.f32 %v1277, %v1438
        %v1440 = vpop.f32.mrb[0].mxu0
        %1441 = vmatprep.mubr.f32.mxu0 0.0
        %v1442 = vand.u32 %v381, 4294901760
        %1443 = vmatmul.mubr.f32.gmra.mrb[0].mxu0 %v1442
        %v1444 = vpop.f32.mrb[0].mxu0
        %v1445 = vadd.f32 %v1283, %v1444
        %v1446 = vpop.f32.mrb[0].mxu0
        %1447 = vmatprep.mubr.f32.mxu0 0.0
        %v1448 = vand.u32 %v384, 4294901760
        %1449 = vmatmul.mubr.f32.gmra.mrb[0].mxu0 %v1448
        %v1450 = vpop.f32.mrb[0].mxu0
        %v1451 = vadd.f32 %v1289, %v1450
        %v1452 = vpop.f32.mrb[0].mxu0
        %1453 = vmatprep.mubr.f32.mxu0 0.0
        %v1454 = vand.u32 %v387, 4294901760
        %1455 = vmatmul.mubr.f32.gmra.mrb[0].mxu0 %v1454
        %v1456 = vpop.f32.mrb[0].mxu0
        %v1457 = vadd.f32 %v1295, %v1456
        %v1458 = vpop.f32.mrb[0].mxu0
        %1459 = vmatprep.mubr.f32.mxu0 0.0
        %v1460 = vand.u32 %v390, 4294901760
        %1461 = vmatmul.mubr.f32.gmra.mrb[0].mxu0 %v1460
        %v1462 = vpop.f32.mrb[0].mxu0
        %v1463 = vadd.f32 %v1301, %v1462
        %v1464 = vpop.f32.mrb[0].mxu0
        %1465 = vmatprep.mubr.f32.mxu0 0.0
        %v1466 = vand.u32 %v393, 4294901760
        %1467 = vmatmul.mubr.f32.gmra.mrb[0].mxu0 %v1466
        %v1468 = vpop.f32.mrb[0].mxu0
        %v1469 = vadd.f32 %v1307, %v1468
        %v1470 = vpop.f32.mrb[0].mxu0
        %1471 = vmatprep.mubr.f32.mxu0 0.0
        %v1472 = vand.u32 %v396, 4294901760
        %1473 = vmatmul.mubr.f32.gmra.mrb[0].mxu0 %v1472
        %v1474 = vpop.f32.mrb[0].mxu0
        %v1475 = vadd.f32 %v1313, %v1474
        %v1476 = vpop.f32.mrb[0].mxu0
        %1477 = vmatprep.mubr.f32.mxu0 0.0
        %v1478 = vand.u32 %v399, 4294901760
        %1479 = vmatmul.mubr.f32.gmra.mrb[0].mxu0 %v1478
        %v1480 = vpop.f32.mrb[0].mxu0
        %v1481 = vadd.f32 %v1319, %v1480
        %v1482 = vpop.f32.mrb[0].mxu0
        %1483 = vmatprep.mubr.f32.mxu0 0.0
        %v1484 = vand.u32 %v402, 4294901760
        %1485 = vmatmul.mubr.f32.gmra.mrb[0].mxu0 %v1484
        %v1486 = vpop.f32.mrb[0].mxu0
        %v1487 = vadd.f32 %v1325, %v1486
        %v1488 = vpop.f32.mrb[0].mxu0
        %1489 = vmatprep.mubr.f32.mxu0 0.0
        %v1490 = vand.u32 %v405, 4294901760
        %1491 = vmatmul.mubr.f32.gmra.mrb[0].mxu0 %v1490
        %v1492 = vpop.f32.mrb[0].mxu0
        %v1493 = vadd.f32 %v1331, %v1492
        %v1494 = vpop.f32.mrb[0].mxu0
        %1495 = vmatprep.mubr.f32.mxu0 0.0
        %v1496 = vand.u32 %v408, 4294901760
        %1497 = vmatmul.mubr.f32.gmra.mrb[0].mxu0 %v1496
        %v1498 = vpop.f32.mrb[0].mxu0
        %v1499 = vadd.f32 %v1337, %v1498
        %v1500 = vpop.f32.mrb[0].mxu0
        %1501 = vmatprep.mubr.f32.mxu0 0.0
        %v1502 = vand.u32 %v411, 4294901760
        %1503 = vmatmul.mubr.f32.gmra.mrb[0].mxu0 %v1502
        %v1504 = vpop.f32.mrb[0].mxu0
        %v1505 = vadd.f32 %v1343, %v1504
        %v1506 = vpop.f32.mrb[0].mxu0
        %1507 = vdwg.mxu0
        %v1508 = vld [vmem:[%s248] sm:$0xf]
        %v1510 = vsel %vm413, %v1508, 0
        %1512 = vmatprep.subr.mxu0 0.0
        %v1513 = vand.u32 %v1510, 4294901760
        %1514 = vmatpush1.msra.mxu0 %v1513
        %1515 = vmatprep.subr.mxu0 0.0
        %1516 = vmatpush1.msra.mxu0 0.0
        %1517 = vmatprep.subr.mxu0 0.0
        %1518 = vmatpush1.msra.mxu0 0.0
        %1519 = vmatprep.subr.mxu0 0.0
        %1520 = vmatpush1.msra.mxu0 0.0
        %1521 = vmatprep.subr.mxu0 0.0
        %1522 = vmatpush1.msra.mxu0 0.0
        %1523 = vmatprep.subr.mxu0 0.0
        %1524 = vmatpush1.msra.mxu0 0.0
        %1525 = vmatprep.subr.mxu0 0.0
        %1526 = vmatpush1.msra.mxu0 0.0
        %1527 = vmatprep.subr.mxu0 0.0
        %1528 = vmatpush1.msra.mxu0 0.0
        %1529 = vmatprep.subr.mxu0 0.0
        %1530 = vmatpush1.msra.mxu0 0.0
        %1531 = vmatprep.subr.mxu0 0.0
        %1532 = vmatpush1.msra.mxu0 0.0
        %1533 = vmatprep.subr.mxu0 0.0
        %1534 = vmatpush1.msra.mxu0 0.0
        %1535 = vmatprep.subr.mxu0 0.0
        %1536 = vmatpush1.msra.mxu0 0.0
        %1537 = vmatprep.subr.mxu0 0.0
        %1538 = vmatpush1.msra.mxu0 0.0
        %1539 = vmatprep.subr.mxu0 0.0
        %1540 = vmatpush1.msra.mxu0 0.0
        %1541 = vmatprep.subr.mxu0 0.0
        %1542 = vmatpush1.msra.mxu0 0.0
        %1543 = vmatprep.subr.mxu0 0.0
        %1544 = vmatpush1.msra.mxu0 0.0
        %1545 = vmatprep.subr.mxu0 0.0
        %1546 = vmatpush1.msra.mxu0 0.0
        %1547 = vmatprep.subr.mxu0 0.0
        %1548 = vmatpush1.msra.mxu0 0.0
        %1549 = vmatprep.subr.mxu0 0.0
        %1550 = vmatpush1.msra.mxu0 0.0
        %1551 = vmatprep.subr.mxu0 0.0
        %1552 = vmatpush1.msra.mxu0 0.0
        %1553 = vmatprep.subr.mxu0 0.0
        %1554 = vmatpush1.msra.mxu0 0.0
        %1555 = vmatprep.subr.mxu0 0.0
        %1556 = vmatpush1.msra.mxu0 0.0
        %1557 = vmatprep.subr.mxu0 0.0
        %1558 = vmatpush1.msra.mxu0 0.0
        %1559 = vmatprep.subr.mxu0 0.0
        %1560 = vmatpush1.msra.mxu0 0.0
        %1561 = vmatprep.subr.mxu0 0.0
        %1562 = vmatpush1.msra.mxu0 0.0
        %1563 = vmatprep.subr.mxu0 0.0
        %1564 = vmatpush1.msra.mxu0 0.0
        %1565 = vmatprep.subr.mxu0 0.0
        %1566 = vmatpush1.msra.mxu0 0.0
        %1567 = vmatprep.subr.mxu0 0.0
        %1568 = vmatpush1.msra.mxu0 0.0
        %1569 = vmatprep.subr.mxu0 0.0
        %1570 = vmatpush1.msra.mxu0 0.0
        %1571 = vmatprep.subr.mxu0 0.0
        %1572 = vmatpush1.msra.mxu0 0.0
        %1573 = vmatprep.subr.mxu0 0.0
        %1574 = vmatpush1.msra.mxu0 0.0
        %1575 = vmatprep.subr.mxu0 0.0
        %1576 = vmatpush1.msra.mxu0 0.0
        %1577 = vmatprep.mubr.f32.mxu0 0.0
        %v1578 = vand.u32 %v366, 4294901760
        %v1579 = vsub.f32 %v366, %v1578
        %v1580 = vand.u32 %v1579, 4294901760
        %v1581 = vsub.f32 %v1579, %v1580
        %v1582 = vand.u32 %v1581, 4294901760
        %1583 = vmatmul.mubr.f32.gmra.mrb[0].mxu0 %v1582
        %v1584 = vpop.f32.mrb[0].mxu0
        %v1585 = vadd.f32 0.0, %v1584
        %v1586 = vpop.f32.mrb[0].mxu0
        %1587 = vmatprep.mubr.f32.mxu0 0.0
        %v1588 = vand.u32 %v369, 4294901760
        %v1589 = vsub.f32 %v369, %v1588
        %v1590 = vand.u32 %v1589, 4294901760
        %v1591 = vsub.f32 %v1589, %v1590
        %v1592 = vand.u32 %v1591, 4294901760
        %1593 = vmatmul.mubr.f32.gmra.mrb[0].mxu0 %v1592
        %v1594 = vpop.f32.mrb[0].mxu0
        %v1595 = vadd.f32 0.0, %v1594
        %v1596 = vpop.f32.mrb[0].mxu0
        %1597 = vmatprep.mubr.f32.mxu0 0.0
        %v1598 = vand.u32 %v372, 4294901760
        %v1599 = vsub.f32 %v372, %v1598
        %v1600 = vand.u32 %v1599, 4294901760
        %v1601 = vsub.f32 %v1599, %v1600
        %v1602 = vand.u32 %v1601, 4294901760
        %1603 = vmatmul.mubr.f32.gmra.mrb[0].mxu0 %v1602
        %v1604 = vpop.f32.mrb[0].mxu0
        %v1605 = vadd.f32 0.0, %v1604
        %v1606 = vpop.f32.mrb[0].mxu0
        %1607 = vmatprep.mubr.f32.mxu0 0.0
        %v1608 = vand.u32 %v375, 4294901760
        %v1609 = vsub.f32 %v375, %v1608
        %v1610 = vand.u32 %v1609, 4294901760
        %v1611 = vsub.f32 %v1609, %v1610
        %v1612 = vand.u32 %v1611, 4294901760
        %1613 = vmatmul.mubr.f32.gmra.mrb[0].mxu0 %v1612
        %v1614 = vpop.f32.mrb[0].mxu0
        %v1615 = vadd.f32 0.0, %v1614
        %v1616 = vpop.f32.mrb[0].mxu0
        %1617 = vmatprep.mubr.f32.mxu0 0.0
        %v1618 = vand.u32 %v378, 4294901760
        %v1619 = vsub.f32 %v378, %v1618
        %v1620 = vand.u32 %v1619, 4294901760
        %v1621 = vsub.f32 %v1619, %v1620
        %v1622 = vand.u32 %v1621, 4294901760
        %1623 = vmatmul.mubr.f32.gmra.mrb[0].mxu0 %v1622
        %v1624 = vpop.f32.mrb[0].mxu0
        %v1625 = vadd.f32 0.0, %v1624
        %v1626 = vpop.f32.mrb[0].mxu0
        %1627 = vmatprep.mubr.f32.mxu0 0.0
        %v1628 = vand.u32 %v381, 4294901760
        %v1629 = vsub.f32 %v381, %v1628
        %v1630 = vand.u32 %v1629, 4294901760
        %v1631 = vsub.f32 %v1629, %v1630
        %v1632 = vand.u32 %v1631, 4294901760
        %1633 = vmatmul.mubr.f32.gmra.mrb[0].mxu0 %v1632
        %v1634 = vpop.f32.mrb[0].mxu0
        %v1635 = vadd.f32 0.0, %v1634
        %v1636 = vpop.f32.mrb[0].mxu0
        %1637 = vmatprep.mubr.f32.mxu0 0.0
        %v1638 = vand.u32 %v384, 4294901760
        %v1639 = vsub.f32 %v384, %v1638
        %v1640 = vand.u32 %v1639, 4294901760
        %v1641 = vsub.f32 %v1639, %v1640
        %v1642 = vand.u32 %v1641, 4294901760
        %1643 = vmatmul.mubr.f32.gmra.mrb[0].mxu0 %v1642
        %v1644 = vpop.f32.mrb[0].mxu0
        %v1645 = vadd.f32 0.0, %v1644
        %v1646 = vpop.f32.mrb[0].mxu0
        %1647 = vmatprep.mubr.f32.mxu0 0.0
        %v1648 = vand.u32 %v387, 4294901760
        %v1649 = vsub.f32 %v387, %v1648
        %v1650 = vand.u32 %v1649, 4294901760
        %v1651 = vsub.f32 %v1649, %v1650
        %v1652 = vand.u32 %v1651, 4294901760
        %1653 = vmatmul.mubr.f32.gmra.mrb[0].mxu0 %v1652
        %v1654 = vpop.f32.mrb[0].mxu0
        %v1655 = vadd.f32 0.0, %v1654
        %v1656 = vpop.f32.mrb[0].mxu0
        %1657 = vmatprep.mubr.f32.mxu0 0.0
        %v1658 = vand.u32 %v390, 4294901760
        %v1659 = vsub.f32 %v390, %v1658
        %v1660 = vand.u32 %v1659, 4294901760
        %v1661 = vsub.f32 %v1659, %v1660
        %v1662 = vand.u32 %v1661, 4294901760
        %1663 = vmatmul.mubr.f32.gmra.mrb[0].mxu0 %v1662
        %v1664 = vpop.f32.mrb[0].mxu0
        %v1665 = vadd.f32 0.0, %v1664
        %v1666 = vpop.f32.mrb[0].mxu0
        %1667 = vmatprep.mubr.f32.mxu0 0.0
        %v1668 = vand.u32 %v393, 4294901760
        %v1669 = vsub.f32 %v393, %v1668
        %v1670 = vand.u32 %v1669, 4294901760
        %v1671 = vsub.f32 %v1669, %v1670
        %v1672 = vand.u32 %v1671, 4294901760
        %1673 = vmatmul.mubr.f32.gmra.mrb[0].mxu0 %v1672
        %v1674 = vpop.f32.mrb[0].mxu0
        %v1675 = vadd.f32 0.0, %v1674
        %v1676 = vpop.f32.mrb[0].mxu0
        %1677 = vmatprep.mubr.f32.mxu0 0.0
        %v1678 = vand.u32 %v396, 4294901760
        %v1679 = vsub.f32 %v396, %v1678
        %v1680 = vand.u32 %v1679, 4294901760
        %v1681 = vsub.f32 %v1679, %v1680
        %v1682 = vand.u32 %v1681, 4294901760
        %1683 = vmatmul.mubr.f32.gmra.mrb[0].mxu0 %v1682
        %v1684 = vpop.f32.mrb[0].mxu0
        %v1685 = vadd.f32 0.0, %v1684
        %v1686 = vpop.f32.mrb[0].mxu0
        %1687 = vmatprep.mubr.f32.mxu0 0.0
        %v1688 = vand.u32 %v399, 4294901760
        %v1689 = vsub.f32 %v399, %v1688
        %v1690 = vand.u32 %v1689, 4294901760
        %v1691 = vsub.f32 %v1689, %v1690
        %v1692 = vand.u32 %v1691, 4294901760
        %1693 = vmatmul.mubr.f32.gmra.mrb[0].mxu0 %v1692
        %v1694 = vpop.f32.mrb[0].mxu0
        %v1695 = vadd.f32 0.0, %v1694
        %v1696 = vpop.f32.mrb[0].mxu0
        %1697 = vmatprep.mubr.f32.mxu0 0.0
        %v1698 = vand.u32 %v402, 4294901760
        %v1699 = vsub.f32 %v402, %v1698
        %v1700 = vand.u32 %v1699, 4294901760
        %v1701 = vsub.f32 %v1699, %v1700
        %v1702 = vand.u32 %v1701, 4294901760
        %1703 = vmatmul.mubr.f32.gmra.mrb[0].mxu0 %v1702
        %v1704 = vpop.f32.mrb[0].mxu0
        %v1705 = vadd.f32 0.0, %v1704
        %v1706 = vpop.f32.mrb[0].mxu0
        %1707 = vmatprep.mubr.f32.mxu0 0.0
        %v1708 = vand.u32 %v405, 4294901760
        %v1709 = vsub.f32 %v405, %v1708
        %v1710 = vand.u32 %v1709, 4294901760
        %v1711 = vsub.f32 %v1709, %v1710
        %v1712 = vand.u32 %v1711, 4294901760
        %1713 = vmatmul.mubr.f32.gmra.mrb[0].mxu0 %v1712
        %v1714 = vpop.f32.mrb[0].mxu0
        %v1715 = vadd.f32 0.0, %v1714
        %v1716 = vpop.f32.mrb[0].mxu0
        %1717 = vmatprep.mubr.f32.mxu0 0.0
        %v1718 = vand.u32 %v408, 4294901760
        %v1719 = vsub.f32 %v408, %v1718
        %v1720 = vand.u32 %v1719, 4294901760
        %v1721 = vsub.f32 %v1719, %v1720
        %v1722 = vand.u32 %v1721, 4294901760
        %1723 = vmatmul.mubr.f32.gmra.mrb[0].mxu0 %v1722
        %v1724 = vpop.f32.mrb[0].mxu0
        %v1725 = vadd.f32 0.0, %v1724
        %v1726 = vpop.f32.mrb[0].mxu0
        %1727 = vmatprep.mubr.f32.mxu0 0.0
        %v1728 = vand.u32 %v411, 4294901760
        %v1729 = vsub.f32 %v411, %v1728
        %v1730 = vand.u32 %v1729, 4294901760
        %v1731 = vsub.f32 %v1729, %v1730
        %v1732 = vand.u32 %v1731, 4294901760
        %1733 = vmatmul.mubr.f32.gmra.mrb[0].mxu0 %v1732
        %v1734 = vpop.f32.mrb[0].mxu0
        %v1735 = vadd.f32 0.0, %v1734
        %v1736 = vpop.f32.mrb[0].mxu0
        %1737 = vdwg.mxu0
        %1738 = vmatprep.subr.mxu0 0.0
        %v1739 = vand.u32 %v1510, 4294901760
        %v1740 = vsub.f32 %v1510, %v1739
        %v1741 = vand.u32 %v1740, 4294901760
        %v1742 = vsub.f32 %v1740, %v1741
        %v1743 = vand.u32 %v1742, 4294901760
        %1744 = vmatpush1.msra.mxu0 %v1743
        %1745 = vmatprep.subr.mxu0 0.0
        %1746 = vmatpush1.msra.mxu0 0.0
        %1747 = vmatprep.subr.mxu0 0.0
        %1748 = vmatpush1.msra.mxu0 0.0
        %1749 = vmatprep.subr.mxu0 0.0
        %1750 = vmatpush1.msra.mxu0 0.0
        %1751 = vmatprep.subr.mxu0 0.0
        %1752 = vmatpush1.msra.mxu0 0.0
        %1753 = vmatprep.subr.mxu0 0.0
        %1754 = vmatpush1.msra.mxu0 0.0
        %1755 = vmatprep.subr.mxu0 0.0
        %1756 = vmatpush1.msra.mxu0 0.0
        %1757 = vmatprep.subr.mxu0 0.0
        %1758 = vmatpush1.msra.mxu0 0.0
        %1759 = vmatprep.subr.mxu0 0.0
        %1760 = vmatpush1.msra.mxu0 0.0
        %1761 = vmatprep.subr.mxu0 0.0
        %1762 = vmatpush1.msra.mxu0 0.0
        %1763 = vmatprep.subr.mxu0 0.0
        %1764 = vmatpush1.msra.mxu0 0.0
        %1765 = vmatprep.subr.mxu0 0.0
        %1766 = vmatpush1.msra.mxu0 0.0
        %1767 = vmatprep.subr.mxu0 0.0
        %1768 = vmatpush1.msra.mxu0 0.0
        %1769 = vmatprep.subr.mxu0 0.0
        %1770 = vmatpush1.msra.mxu0 0.0
        %1771 = vmatprep.subr.mxu0 0.0
        %1772 = vmatpush1.msra.mxu0 0.0
        %1773 = vmatprep.subr.mxu0 0.0
        %1774 = vmatpush1.msra.mxu0 0.0
        %1775 = vmatprep.subr.mxu0 0.0
        %1776 = vmatpush1.msra.mxu0 0.0
        %1777 = vmatprep.subr.mxu0 0.0
        %1778 = vmatpush1.msra.mxu0 0.0
        %1779 = vmatprep.subr.mxu0 0.0
        %1780 = vmatpush1.msra.mxu0 0.0
        %1781 = vmatprep.subr.mxu0 0.0
        %1782 = vmatpush1.msra.mxu0 0.0
        %1783 = vmatprep.subr.mxu0 0.0
        %1784 = vmatpush1.msra.mxu0 0.0
        %1785 = vmatprep.subr.mxu0 0.0
        %1786 = vmatpush1.msra.mxu0 0.0
        %1787 = vmatprep.subr.mxu0 0.0
        %1788 = vmatpush1.msra.mxu0 0.0
        %1789 = vmatprep.subr.mxu0 0.0
        %1790 = vmatpush1.msra.mxu0 0.0
        %1791 = vmatprep.subr.mxu0 0.0
        %1792 = vmatpush1.msra.mxu0 0.0
        %1793 = vmatprep.subr.mxu0 0.0
        %1794 = vmatpush1.msra.mxu0 0.0
        %1795 = vmatprep.subr.mxu0 0.0
        %1796 = vmatpush1.msra.mxu0 0.0
        %1797 = vmatprep.subr.mxu0 0.0
        %1798 = vmatpush1.msra.mxu0 0.0
        %1799 = vmatprep.subr.mxu0 0.0
        %1800 = vmatpush1.msra.mxu0 0.0
        %1801 = vmatprep.subr.mxu0 0.0
        %1802 = vmatpush1.msra.mxu0 0.0
        %1803 = vmatprep.subr.mxu0 0.0
        %1804 = vmatpush1.msra.mxu0 0.0
        %1805 = vmatprep.subr.mxu0 0.0
        %1806 = vmatpush1.msra.mxu0 0.0
        %1807 = vmatprep.mubr.f32.mxu0 0.0
        %v1808 = vand.u32 %v366, 4294901760
        %1809 = vmatmul.mubr.f32.gmra.mrb[0].mxu0 %v1808
        %v1810 = vpop.f32.mrb[0].mxu0
        %v1811 = vadd.f32 %v1585, %v1810
        %v1812 = vpop.f32.mrb[0].mxu0
        %1813 = vmatprep.mubr.f32.mxu0 0.0
        %v1814 = vand.u32 %v369, 4294901760
        %1815 = vmatmul.mubr.f32.gmra.mrb[0].mxu0 %v1814
        %v1816 = vpop.f32.mrb[0].mxu0
        %v1817 = vadd.f32 %v1595, %v1816
        %v1818 = vpop.f32.mrb[0].mxu0
        %1819 = vmatprep.mubr.f32.mxu0 0.0
        %v1820 = vand.u32 %v372, 4294901760
        %1821 = vmatmul.mubr.f32.gmra.mrb[0].mxu0 %v1820
        %v1822 = vpop.f32.mrb[0].mxu0
        %v1823 = vadd.f32 %v1605, %v1822
        %v1824 = vpop.f32.mrb[0].mxu0
        %1825 = vmatprep.mubr.f32.mxu0 0.0
        %v1826 = vand.u32 %v375, 4294901760
        %1827 = vmatmul.mubr.f32.gmra.mrb[0].mxu0 %v1826
        %v1828 = vpop.f32.mrb[0].mxu0
        %v1829 = vadd.f32 %v1615, %v1828
        %v1830 = vpop.f32.mrb[0].mxu0
        %1831 = vmatprep.mubr.f32.mxu0 0.0
        %v1832 = vand.u32 %v378, 4294901760
        %1833 = vmatmul.mubr.f32.gmra.mrb[0].mxu0 %v1832
        %v1834 = vpop.f32.mrb[0].mxu0
        %v1835 = vadd.f32 %v1625, %v1834
        %v1836 = vpop.f32.mrb[0].mxu0
        %1837 = vmatprep.mubr.f32.mxu0 0.0
        %v1838 = vand.u32 %v381, 4294901760
        %1839 = vmatmul.mubr.f32.gmra.mrb[0].mxu0 %v1838
        %v1840 = vpop.f32.mrb[0].mxu0
        %v1841 = vadd.f32 %v1635, %v1840
        %v1842 = vpop.f32.mrb[0].mxu0
        %1843 = vmatprep.mubr.f32.mxu0 0.0
        %v1844 = vand.u32 %v384, 4294901760
        %1845 = vmatmul.mubr.f32.gmra.mrb[0].mxu0 %v1844
        %v1846 = vpop.f32.mrb[0].mxu0
        %v1847 = vadd.f32 %v1645, %v1846
        %v1848 = vpop.f32.mrb[0].mxu0
        %1849 = vmatprep.mubr.f32.mxu0 0.0
        %v1850 = vand.u32 %v387, 4294901760
        %1851 = vmatmul.mubr.f32.gmra.mrb[0].mxu0 %v1850
        %v1852 = vpop.f32.mrb[0].mxu0
        %v1853 = vadd.f32 %v1655, %v1852
        %v1854 = vpop.f32.mrb[0].mxu0
        %1855 = vmatprep.mubr.f32.mxu0 0.0
        %v1856 = vand.u32 %v390, 4294901760
        %1857 = vmatmul.mubr.f32.gmra.mrb[0].mxu0 %v1856
        %v1858 = vpop.f32.mrb[0].mxu0
        %v1859 = vadd.f32 %v1665, %v1858
        %v1860 = vpop.f32.mrb[0].mxu0
        %1861 = vmatprep.mubr.f32.mxu0 0.0
        %v1862 = vand.u32 %v393, 4294901760
        %1863 = vmatmul.mubr.f32.gmra.mrb[0].mxu0 %v1862
        %v1864 = vpop.f32.mrb[0].mxu0
        %v1865 = vadd.f32 %v1675, %v1864
        %v1866 = vpop.f32.mrb[0].mxu0
        %1867 = vmatprep.mubr.f32.mxu0 0.0
        %v1868 = vand.u32 %v396, 4294901760
        %1869 = vmatmul.mubr.f32.gmra.mrb[0].mxu0 %v1868
        %v1870 = vpop.f32.mrb[0].mxu0
        %v1871 = vadd.f32 %v1685, %v1870
        %v1872 = vpop.f32.mrb[0].mxu0
        %1873 = vmatprep.mubr.f32.mxu0 0.0
        %v1874 = vand.u32 %v399, 4294901760
        %1875 = vmatmul.mubr.f32.gmra.mrb[0].mxu0 %v1874
        %v1876 = vpop.f32.mrb[0].mxu0
        %v1877 = vadd.f32 %v1695, %v1876
        %v1878 = vpop.f32.mrb[0].mxu0
        %1879 = vmatprep.mubr.f32.mxu0 0.0
        %v1880 = vand.u32 %v402, 4294901760
        %1881 = vmatmul.mubr.f32.gmra.mrb[0].mxu0 %v1880
        %v1882 = vpop.f32.mrb[0].mxu0
        %v1883 = vadd.f32 %v1705, %v1882
        %v1884 = vpop.f32.mrb[0].mxu0
        %1885 = vmatprep.mubr.f32.mxu0 0.0
        %v1886 = vand.u32 %v405, 4294901760
        %1887 = vmatmul.mubr.f32.gmra.mrb[0].mxu0 %v1886
        %v1888 = vpop.f32.mrb[0].mxu0
        %v1889 = vadd.f32 %v1715, %v1888
        %v1890 = vpop.f32.mrb[0].mxu0
        %1891 = vmatprep.mubr.f32.mxu0 0.0
        %v1892 = vand.u32 %v408, 4294901760
        %1893 = vmatmul.mubr.f32.gmra.mrb[0].mxu0 %v1892
        %v1894 = vpop.f32.mrb[0].mxu0
        %v1895 = vadd.f32 %v1725, %v1894
        %v1896 = vpop.f32.mrb[0].mxu0
        %1897 = vmatprep.mubr.f32.mxu0 0.0
        %v1898 = vand.u32 %v411, 4294901760
        %1899 = vmatmul.mubr.f32.gmra.mrb[0].mxu0 %v1898
        %v1900 = vpop.f32.mrb[0].mxu0
        %v1901 = vadd.f32 %v1735, %v1900
        %v1902 = vpop.f32.mrb[0].mxu0
        %1903 = vdwg.mxu0
        %1904 = vmatprep.subr.mxu0 0.0
        %v1905 = vand.u32 %v1510, 4294901760
        %v1906 = vsub.f32 %v1510, %v1905
        %1907 = vmatpush1.msra.mxu0 %v1906
        %1908 = vmatprep.subr.mxu0 0.0
        %1909 = vmatpush1.msra.mxu0 0.0
        %1910 = vmatprep.subr.mxu0 0.0
        %1911 = vmatpush1.msra.mxu0 0.0
        %1912 = vmatprep.subr.mxu0 0.0
        %1913 = vmatpush1.msra.mxu0 0.0
        %1914 = vmatprep.subr.mxu0 0.0
        %1915 = vmatpush1.msra.mxu0 0.0
        %1916 = vmatprep.subr.mxu0 0.0
        %1917 = vmatpush1.msra.mxu0 0.0
        %1918 = vmatprep.subr.mxu0 0.0
        %1919 = vmatpush1.msra.mxu0 0.0
        %1920 = vmatprep.subr.mxu0 0.0
        %1921 = vmatpush1.msra.mxu0 0.0
        %1922 = vmatprep.subr.mxu0 0.0
        %1923 = vmatpush1.msra.mxu0 0.0
        %1924 = vmatprep.subr.mxu0 0.0
        %1925 = vmatpush1.msra.mxu0 0.0
        %1926 = vmatprep.subr.mxu0 0.0
        %1927 = vmatpush1.msra.mxu0 0.0
        %1928 = vmatprep.subr.mxu0 0.0
        %1929 = vmatpush1.msra.mxu0 0.0
        %1930 = vmatprep.subr.mxu0 0.0
        %1931 = vmatpush1.msra.mxu0 0.0
        %1932 = vmatprep.subr.mxu0 0.0
        %1933 = vmatpush1.msra.mxu0 0.0
        %1934 = vmatprep.subr.mxu0 0.0
        %1935 = vmatpush1.msra.mxu0 0.0
        %1936 = vmatprep.subr.mxu0 0.0
        %1937 = vmatpush1.msra.mxu0 0.0
        %1938 = vmatprep.subr.mxu0 0.0
        %1939 = vmatpush1.msra.mxu0 0.0
        %1940 = vmatprep.subr.mxu0 0.0
        %1941 = vmatpush1.msra.mxu0 0.0
        %1942 = vmatprep.subr.mxu0 0.0
        %1943 = vmatpush1.msra.mxu0 0.0
        %1944 = vmatprep.subr.mxu0 0.0
        %1945 = vmatpush1.msra.mxu0 0.0
        %1946 = vmatprep.subr.mxu0 0.0
        %1947 = vmatpush1.msra.mxu0 0.0
        %1948 = vmatprep.subr.mxu0 0.0
        %1949 = vmatpush1.msra.mxu0 0.0
        %1950 = vmatprep.subr.mxu0 0.0
        %1951 = vmatpush1.msra.mxu0 0.0
        %1952 = vmatprep.subr.mxu0 0.0
        %1953 = vmatpush1.msra.mxu0 0.0
        %1954 = vmatprep.subr.mxu0 0.0
        %1955 = vmatpush1.msra.mxu0 0.0
        %1956 = vmatprep.subr.mxu0 0.0
        %1957 = vmatpush1.msra.mxu0 0.0
        %1958 = vmatprep.subr.mxu0 0.0
        %1959 = vmatpush1.msra.mxu0 0.0
        %1960 = vmatprep.subr.mxu0 0.0
        %1961 = vmatpush1.msra.mxu0 0.0
        %1962 = vmatprep.subr.mxu0 0.0
        %1963 = vmatpush1.msra.mxu0 0.0
        %1964 = vmatprep.subr.mxu0 0.0
        %1965 = vmatpush1.msra.mxu0 0.0
        %1966 = vmatprep.subr.mxu0 0.0
        %1967 = vmatpush1.msra.mxu0 0.0
        %1968 = vmatprep.subr.mxu0 0.0
        %1969 = vmatpush1.msra.mxu0 0.0
        %1970 = vmatprep.mubr.f32.mxu0 0.0
        %v1971 = vand.u32 %v366, 4294901760
        %v1972 = vsub.f32 %v366, %v1971
        %1973 = vmatmul.mubr.f32.gmra.mrb[0].mxu0 %v1972
        %v1974 = vpop.f32.mrb[0].mxu0
        %v1975 = vadd.f32 %v1811, %v1974
        %v1976 = vpop.f32.mrb[0].mxu0
        %1977 = vmatprep.mubr.f32.mxu0 0.0
        %v1978 = vand.u32 %v369, 4294901760
        %v1979 = vsub.f32 %v369, %v1978
        %1980 = vmatmul.mubr.f32.gmra.mrb[0].mxu0 %v1979
        %v1981 = vpop.f32.mrb[0].mxu0
        %v1982 = vadd.f32 %v1817, %v1981
        %v1983 = vpop.f32.mrb[0].mxu0
        %1984 = vmatprep.mubr.f32.mxu0 0.0
        %v1985 = vand.u32 %v372, 4294901760
        %v1986 = vsub.f32 %v372, %v1985
        %1987 = vmatmul.mubr.f32.gmra.mrb[0].mxu0 %v1986
        %v1988 = vpop.f32.mrb[0].mxu0
        %v1989 = vadd.f32 %v1823, %v1988
        %v1990 = vpop.f32.mrb[0].mxu0
        %1991 = vmatprep.mubr.f32.mxu0 0.0
        %v1992 = vand.u32 %v375, 4294901760
        %v1993 = vsub.f32 %v375, %v1992
        %1994 = vmatmul.mubr.f32.gmra.mrb[0].mxu0 %v1993
        %v1995 = vpop.f32.mrb[0].mxu0
        %v1996 = vadd.f32 %v1829, %v1995
        %v1997 = vpop.f32.mrb[0].mxu0
        %1998 = vmatprep.mubr.f32.mxu0 0.0
        %v1999 = vand.u32 %v378, 4294901760
        %v2000 = vsub.f32 %v378, %v1999
        %2001 = vmatmul.mubr.f32.gmra.mrb[0].mxu0 %v2000
        %v2002 = vpop.f32.mrb[0].mxu0
        %v2003 = vadd.f32 %v1835, %v2002
        %v2004 = vpop.f32.mrb[0].mxu0
        %2005 = vmatprep.mubr.f32.mxu0 0.0
        %v2006 = vand.u32 %v381, 4294901760
        %v2007 = vsub.f32 %v381, %v2006
        %2008 = vmatmul.mubr.f32.gmra.mrb[0].mxu0 %v2007
        %v2009 = vpop.f32.mrb[0].mxu0
        %v2010 = vadd.f32 %v1841, %v2009
        %v2011 = vpop.f32.mrb[0].mxu0
        %2012 = vmatprep.mubr.f32.mxu0 0.0
        %v2013 = vand.u32 %v384, 4294901760
        %v2014 = vsub.f32 %v384, %v2013
        %2015 = vmatmul.mubr.f32.gmra.mrb[0].mxu0 %v2014
        %v2016 = vpop.f32.mrb[0].mxu0
        %v2017 = vadd.f32 %v1847, %v2016
        %v2018 = vpop.f32.mrb[0].mxu0
        %2019 = vmatprep.mubr.f32.mxu0 0.0
        %v2020 = vand.u32 %v387, 4294901760
        %v2021 = vsub.f32 %v387, %v2020
        %2022 = vmatmul.mubr.f32.gmra.mrb[0].mxu0 %v2021
        %v2023 = vpop.f32.mrb[0].mxu0
        %v2024 = vadd.f32 %v1853, %v2023
        %v2025 = vpop.f32.mrb[0].mxu0
        %2026 = vmatprep.mubr.f32.mxu0 0.0
        %v2027 = vand.u32 %v390, 4294901760
        %v2028 = vsub.f32 %v390, %v2027
        %2029 = vmatmul.mubr.f32.gmra.mrb[0].mxu0 %v2028
        %v2030 = vpop.f32.mrb[0].mxu0
        %v2031 = vadd.f32 %v1859, %v2030
        %v2032 = vpop.f32.mrb[0].mxu0
        %2033 = vmatprep.mubr.f32.mxu0 0.0
        %v2034 = vand.u32 %v393, 4294901760
        %v2035 = vsub.f32 %v393, %v2034
        %2036 = vmatmul.mubr.f32.gmra.mrb[0].mxu0 %v2035
        %v2037 = vpop.f32.mrb[0].mxu0
        %v2038 = vadd.f32 %v1865, %v2037
        %v2039 = vpop.f32.mrb[0].mxu0
        %2040 = vmatprep.mubr.f32.mxu0 0.0
        %v2041 = vand.u32 %v396, 4294901760
        %v2042 = vsub.f32 %v396, %v2041
        %2043 = vmatmul.mubr.f32.gmra.mrb[0].mxu0 %v2042
        %v2044 = vpop.f32.mrb[0].mxu0
        %v2045 = vadd.f32 %v1871, %v2044
        %v2046 = vpop.f32.mrb[0].mxu0
        %2047 = vmatprep.mubr.f32.mxu0 0.0
        %v2048 = vand.u32 %v399, 4294901760
        %v2049 = vsub.f32 %v399, %v2048
        %2050 = vmatmul.mubr.f32.gmra.mrb[0].mxu0 %v2049
        %v2051 = vpop.f32.mrb[0].mxu0
        %v2052 = vadd.f32 %v1877, %v2051
        %v2053 = vpop.f32.mrb[0].mxu0
        %2054 = vmatprep.mubr.f32.mxu0 0.0
        %v2055 = vand.u32 %v402, 4294901760
        %v2056 = vsub.f32 %v402, %v2055
        %2057 = vmatmul.mubr.f32.gmra.mrb[0].mxu0 %v2056
        %v2058 = vpop.f32.mrb[0].mxu0
        %v2059 = vadd.f32 %v1883, %v2058
        %v2060 = vpop.f32.mrb[0].mxu0
        %2061 = vmatprep.mubr.f32.mxu0 0.0
        %v2062 = vand.u32 %v405, 4294901760
        %v2063 = vsub.f32 %v405, %v2062
        %2064 = vmatmul.mubr.f32.gmra.mrb[0].mxu0 %v2063
        %v2065 = vpop.f32.mrb[0].mxu0
        %v2066 = vadd.f32 %v1889, %v2065
        %v2067 = vpop.f32.mrb[0].mxu0
        %2068 = vmatprep.mubr.f32.mxu0 0.0
        %v2069 = vand.u32 %v408, 4294901760
        %v2070 = vsub.f32 %v408, %v2069
        %2071 = vmatmul.mubr.f32.gmra.mrb[0].mxu0 %v2070
        %v2072 = vpop.f32.mrb[0].mxu0
        %v2073 = vadd.f32 %v1895, %v2072
        %v2074 = vpop.f32.mrb[0].mxu0
        %2075 = vmatprep.mubr.f32.mxu0 0.0
        %v2076 = vand.u32 %v411, 4294901760
        %v2077 = vsub.f32 %v411, %v2076
        %2078 = vmatmul.mubr.f32.gmra.mrb[0].mxu0 %v2077
        %v2079 = vpop.f32.mrb[0].mxu0
        %v2080 = vadd.f32 %v1901, %v2079
        %v2081 = vpop.f32.mrb[0].mxu0
        %2082 = vdwg.mxu0
        %2083 = vmatprep.subr.mxu0 0.0
        %v2084 = vand.u32 %v1510, 4294901760
        %2085 = vmatpush1.msra.mxu0 %v2084
        %2086 = vmatprep.subr.mxu0 0.0
        %2087 = vmatpush1.msra.mxu0 0.0
        %2088 = vmatprep.subr.mxu0 0.0
        %2089 = vmatpush1.msra.mxu0 0.0
        %2090 = vmatprep.subr.mxu0 0.0
        %2091 = vmatpush1.msra.mxu0 0.0
        %2092 = vmatprep.subr.mxu0 0.0
        %2093 = vmatpush1.msra.mxu0 0.0
        %2094 = vmatprep.subr.mxu0 0.0
        %2095 = vmatpush1.msra.mxu0 0.0
        %2096 = vmatprep.subr.mxu0 0.0
        %2097 = vmatpush1.msra.mxu0 0.0
        %2098 = vmatprep.subr.mxu0 0.0
        %2099 = vmatpush1.msra.mxu0 0.0
        %2100 = vmatprep.subr.mxu0 0.0
        %2101 = vmatpush1.msra.mxu0 0.0
        %2102 = vmatprep.subr.mxu0 0.0
        %2103 = vmatpush1.msra.mxu0 0.0
        %2104 = vmatprep.subr.mxu0 0.0
        %2105 = vmatpush1.msra.mxu0 0.0
        %2106 = vmatprep.subr.mxu0 0.0
        %2107 = vmatpush1.msra.mxu0 0.0
        %2108 = vmatprep.subr.mxu0 0.0
        %2109 = vmatpush1.msra.mxu0 0.0
        %2110 = vmatprep.subr.mxu0 0.0
        %2111 = vmatpush1.msra.mxu0 0.0
        %2112 = vmatprep.subr.mxu0 0.0
        %2113 = vmatpush1.msra.mxu0 0.0
        %2114 = vmatprep.subr.mxu0 0.0
        %2115 = vmatpush1.msra.mxu0 0.0
        %2116 = vmatprep.subr.mxu0 0.0
        %2117 = vmatpush1.msra.mxu0 0.0
        %2118 = vmatprep.subr.mxu0 0.0
        %2119 = vmatpush1.msra.mxu0 0.0
        %2120 = vmatprep.subr.mxu0 0.0
        %2121 = vmatpush1.msra.mxu0 0.0
        %2122 = vmatprep.subr.mxu0 0.0
        %2123 = vmatpush1.msra.mxu0 0.0
        %2124 = vmatprep.subr.mxu0 0.0
        %2125 = vmatpush1.msra.mxu0 0.0
        %2126 = vmatprep.subr.mxu0 0.0
        %2127 = vmatpush1.msra.mxu0 0.0
        %2128 = vmatprep.subr.mxu0 0.0
        %2129 = vmatpush1.msra.mxu0 0.0
        %2130 = vmatprep.subr.mxu0 0.0
        %2131 = vmatpush1.msra.mxu0 0.0
        %2132 = vmatprep.subr.mxu0 0.0
        %2133 = vmatpush1.msra.mxu0 0.0
        %2134 = vmatprep.subr.mxu0 0.0
        %2135 = vmatpush1.msra.mxu0 0.0
        %2136 = vmatprep.subr.mxu0 0.0
        %2137 = vmatpush1.msra.mxu0 0.0
        %2138 = vmatprep.subr.mxu0 0.0
        %2139 = vmatpush1.msra.mxu0 0.0
        %2140 = vmatprep.subr.mxu0 0.0
        %2141 = vmatpush1.msra.mxu0 0.0
        %2142 = vmatprep.subr.mxu0 0.0
        %2143 = vmatpush1.msra.mxu0 0.0
        %2144 = vmatprep.subr.mxu0 0.0
        %2145 = vmatpush1.msra.mxu0 0.0
        %2146 = vmatprep.subr.mxu0 0.0
        %2147 = vmatpush1.msra.mxu0 0.0
        %2148 = vmatprep.mubr.f32.mxu0 0.0
        %v2149 = vand.u32 %v366, 4294901760
        %v2150 = vsub.f32 %v366, %v2149
        %v2151 = vand.u32 %v2150, 4294901760
        %2152 = vmatmul.mubr.f32.gmra.mrb[0].mxu0 %v2151
        %v2153 = vpop.f32.mrb[0].mxu0
        %v2154 = vadd.f32 %v1975, %v2153
        %v2155 = vpop.f32.mrb[0].mxu0
        %2156 = vmatprep.mubr.f32.mxu0 0.0
        %v2157 = vand.u32 %v369, 4294901760
        %v2158 = vsub.f32 %v369, %v2157
        %v2159 = vand.u32 %v2158, 4294901760
        %2160 = vmatmul.mubr.f32.gmra.mrb[0].mxu0 %v2159
        %v2161 = vpop.f32.mrb[0].mxu0
        %v2162 = vadd.f32 %v1982, %v2161
        %v2163 = vpop.f32.mrb[0].mxu0
        %2164 = vmatprep.mubr.f32.mxu0 0.0
        %v2165 = vand.u32 %v372, 4294901760
        %v2166 = vsub.f32 %v372, %v2165
        %v2167 = vand.u32 %v2166, 4294901760
        %2168 = vmatmul.mubr.f32.gmra.mrb[0].mxu0 %v2167
        %v2169 = vpop.f32.mrb[0].mxu0
        %v2170 = vadd.f32 %v1989, %v2169
        %v2171 = vpop.f32.mrb[0].mxu0
        %2172 = vmatprep.mubr.f32.mxu0 0.0
        %v2173 = vand.u32 %v375, 4294901760
        %v2174 = vsub.f32 %v375, %v2173
        %v2175 = vand.u32 %v2174, 4294901760
        %2176 = vmatmul.mubr.f32.gmra.mrb[0].mxu0 %v2175
        %v2177 = vpop.f32.mrb[0].mxu0
        %v2178 = vadd.f32 %v1996, %v2177
        %v2179 = vpop.f32.mrb[0].mxu0
        %2180 = vmatprep.mubr.f32.mxu0 0.0
        %v2181 = vand.u32 %v378, 4294901760
        %v2182 = vsub.f32 %v378, %v2181
        %v2183 = vand.u32 %v2182, 4294901760
        %2184 = vmatmul.mubr.f32.gmra.mrb[0].mxu0 %v2183
        %v2185 = vpop.f32.mrb[0].mxu0
        %v2186 = vadd.f32 %v2003, %v2185
        %v2187 = vpop.f32.mrb[0].mxu0
        %2188 = vmatprep.mubr.f32.mxu0 0.0
        %v2189 = vand.u32 %v381, 4294901760
        %v2190 = vsub.f32 %v381, %v2189
        %v2191 = vand.u32 %v2190, 4294901760
        %2192 = vmatmul.mubr.f32.gmra.mrb[0].mxu0 %v2191
        %v2193 = vpop.f32.mrb[0].mxu0
        %v2194 = vadd.f32 %v2010, %v2193
        %v2195 = vpop.f32.mrb[0].mxu0
        %2196 = vmatprep.mubr.f32.mxu0 0.0
        %v2197 = vand.u32 %v384, 4294901760
        %v2198 = vsub.f32 %v384, %v2197
        %v2199 = vand.u32 %v2198, 4294901760
        %2200 = vmatmul.mubr.f32.gmra.mrb[0].mxu0 %v2199
        %v2201 = vpop.f32.mrb[0].mxu0
        %v2202 = vadd.f32 %v2017, %v2201
        %v2203 = vpop.f32.mrb[0].mxu0
        %2204 = vmatprep.mubr.f32.mxu0 0.0
        %v2205 = vand.u32 %v387, 4294901760
        %v2206 = vsub.f32 %v387, %v2205
        %v2207 = vand.u32 %v2206, 4294901760
        %2208 = vmatmul.mubr.f32.gmra.mrb[0].mxu0 %v2207
        %v2209 = vpop.f32.mrb[0].mxu0
        %v2210 = vadd.f32 %v2024, %v2209
        %v2211 = vpop.f32.mrb[0].mxu0
        %2212 = vmatprep.mubr.f32.mxu0 0.0
        %v2213 = vand.u32 %v390, 4294901760
        %v2214 = vsub.f32 %v390, %v2213
        %v2215 = vand.u32 %v2214, 4294901760
        %2216 = vmatmul.mubr.f32.gmra.mrb[0].mxu0 %v2215
        %v2217 = vpop.f32.mrb[0].mxu0
        %v2218 = vadd.f32 %v2031, %v2217
        %v2219 = vpop.f32.mrb[0].mxu0
        %2220 = vmatprep.mubr.f32.mxu0 0.0
        %v2221 = vand.u32 %v393, 4294901760
        %v2222 = vsub.f32 %v393, %v2221
        %v2223 = vand.u32 %v2222, 4294901760
        %2224 = vmatmul.mubr.f32.gmra.mrb[0].mxu0 %v2223
        %v2225 = vpop.f32.mrb[0].mxu0
        %v2226 = vadd.f32 %v2038, %v2225
        %v2227 = vpop.f32.mrb[0].mxu0
        %2228 = vmatprep.mubr.f32.mxu0 0.0
        %v2229 = vand.u32 %v396, 4294901760
        %v2230 = vsub.f32 %v396, %v2229
        %v2231 = vand.u32 %v2230, 4294901760
        %2232 = vmatmul.mubr.f32.gmra.mrb[0].mxu0 %v2231
        %v2233 = vpop.f32.mrb[0].mxu0
        %v2234 = vadd.f32 %v2045, %v2233
        %v2235 = vpop.f32.mrb[0].mxu0
        %2236 = vmatprep.mubr.f32.mxu0 0.0
        %v2237 = vand.u32 %v399, 4294901760
        %v2238 = vsub.f32 %v399, %v2237
        %v2239 = vand.u32 %v2238, 4294901760
        %2240 = vmatmul.mubr.f32.gmra.mrb[0].mxu0 %v2239
        %v2241 = vpop.f32.mrb[0].mxu0
        %v2242 = vadd.f32 %v2052, %v2241
        %v2243 = vpop.f32.mrb[0].mxu0
        %2244 = vmatprep.mubr.f32.mxu0 0.0
        %v2245 = vand.u32 %v402, 4294901760
        %v2246 = vsub.f32 %v402, %v2245
        %v2247 = vand.u32 %v2246, 4294901760
        %2248 = vmatmul.mubr.f32.gmra.mrb[0].mxu0 %v2247
        %v2249 = vpop.f32.mrb[0].mxu0
        %v2250 = vadd.f32 %v2059, %v2249
        %v2251 = vpop.f32.mrb[0].mxu0
        %2252 = vmatprep.mubr.f32.mxu0 0.0
        %v2253 = vand.u32 %v405, 4294901760
        %v2254 = vsub.f32 %v405, %v2253
        %v2255 = vand.u32 %v2254, 4294901760
        %2256 = vmatmul.mubr.f32.gmra.mrb[0].mxu0 %v2255
        %v2257 = vpop.f32.mrb[0].mxu0
        %v2258 = vadd.f32 %v2066, %v2257
        %v2259 = vpop.f32.mrb[0].mxu0
        %2260 = vmatprep.mubr.f32.mxu0 0.0
        %v2261 = vand.u32 %v408, 4294901760
        %v2262 = vsub.f32 %v408, %v2261
        %v2263 = vand.u32 %v2262, 4294901760
        %2264 = vmatmul.mubr.f32.gmra.mrb[0].mxu0 %v2263
        %v2265 = vpop.f32.mrb[0].mxu0
        %v2266 = vadd.f32 %v2073, %v2265
        %v2267 = vpop.f32.mrb[0].mxu0
        %2268 = vmatprep.mubr.f32.mxu0 0.0
        %v2269 = vand.u32 %v411, 4294901760
        %v2270 = vsub.f32 %v411, %v2269
        %v2271 = vand.u32 %v2270, 4294901760
        %2272 = vmatmul.mubr.f32.gmra.mrb[0].mxu0 %v2271
        %v2273 = vpop.f32.mrb[0].mxu0
        %v2274 = vadd.f32 %v2080, %v2273
        %v2275 = vpop.f32.mrb[0].mxu0
        %2276 = vdwg.mxu0
        %2277 = vmatprep.subr.mxu0 0.0
        %v2278 = vand.u32 %v1510, 4294901760
        %v2279 = vsub.f32 %v1510, %v2278
        %v2280 = vand.u32 %v2279, 4294901760
        %2281 = vmatpush1.msra.mxu0 %v2280
        %2282 = vmatprep.subr.mxu0 0.0
        %2283 = vmatpush1.msra.mxu0 0.0
        %2284 = vmatprep.subr.mxu0 0.0
        %2285 = vmatpush1.msra.mxu0 0.0
        %2286 = vmatprep.subr.mxu0 0.0
        %2287 = vmatpush1.msra.mxu0 0.0
        %2288 = vmatprep.subr.mxu0 0.0
        %2289 = vmatpush1.msra.mxu0 0.0
        %2290 = vmatprep.subr.mxu0 0.0
        %2291 = vmatpush1.msra.mxu0 0.0
        %2292 = vmatprep.subr.mxu0 0.0
        %2293 = vmatpush1.msra.mxu0 0.0
        %2294 = vmatprep.subr.mxu0 0.0
        %2295 = vmatpush1.msra.mxu0 0.0
        %2296 = vmatprep.subr.mxu0 0.0
        %2297 = vmatpush1.msra.mxu0 0.0
        %2298 = vmatprep.subr.mxu0 0.0
        %2299 = vmatpush1.msra.mxu0 0.0
        %2300 = vmatprep.subr.mxu0 0.0
        %2301 = vmatpush1.msra.mxu0 0.0
        %2302 = vmatprep.subr.mxu0 0.0
        %2303 = vmatpush1.msra.mxu0 0.0
        %2304 = vmatprep.subr.mxu0 0.0
        %2305 = vmatpush1.msra.mxu0 0.0
        %2306 = vmatprep.subr.mxu0 0.0
        %2307 = vmatpush1.msra.mxu0 0.0
        %2308 = vmatprep.subr.mxu0 0.0
        %2309 = vmatpush1.msra.mxu0 0.0
        %2310 = vmatprep.subr.mxu0 0.0
        %2311 = vmatpush1.msra.mxu0 0.0
        %2312 = vmatprep.subr.mxu0 0.0
        %2313 = vmatpush1.msra.mxu0 0.0
        %2314 = vmatprep.subr.mxu0 0.0
        %2315 = vmatpush1.msra.mxu0 0.0
        %2316 = vmatprep.subr.mxu0 0.0
        %2317 = vmatpush1.msra.mxu0 0.0
        %2318 = vmatprep.subr.mxu0 0.0
        %2319 = vmatpush1.msra.mxu0 0.0
        %2320 = vmatprep.subr.mxu0 0.0
        %2321 = vmatpush1.msra.mxu0 0.0
        %2322 = vmatprep.subr.mxu0 0.0
        %2323 = vmatpush1.msra.mxu0 0.0
        %2324 = vmatprep.subr.mxu0 0.0
        %2325 = vmatpush1.msra.mxu0 0.0
        %2326 = vmatprep.subr.mxu0 0.0
        %2327 = vmatpush1.msra.mxu0 0.0
        %2328 = vmatprep.subr.mxu0 0.0
        %2329 = vmatpush1.msra.mxu0 0.0
        %2330 = vmatprep.subr.mxu0 0.0
        %2331 = vmatpush1.msra.mxu0 0.0
        %2332 = vmatprep.subr.mxu0 0.0
        %2333 = vmatpush1.msra.mxu0 0.0
        %2334 = vmatprep.subr.mxu0 0.0
        %2335 = vmatpush1.msra.mxu0 0.0
        %2336 = vmatprep.subr.mxu0 0.0
        %2337 = vmatpush1.msra.mxu0 0.0
        %2338 = vmatprep.subr.mxu0 0.0
        %2339 = vmatpush1.msra.mxu0 0.0
        %2340 = vmatprep.subr.mxu0 0.0
        %2341 = vmatpush1.msra.mxu0 0.0
        %2342 = vmatprep.subr.mxu0 0.0
        %2343 = vmatpush1.msra.mxu0 0.0
        %2344 = vmatprep.mubr.f32.mxu0 0.0
        %v2345 = vand.u32 %v366, 4294901760
        %2346 = vmatmul.mubr.f32.gmra.mrb[0].mxu0 %v2345
        %v2347 = vpop.f32.mrb[0].mxu0
        %v2348 = vadd.f32 %v2154, %v2347
        %v2349 = vpop.f32.mrb[0].mxu0
        %2350 = vmatprep.mubr.f32.mxu0 0.0
        %v2351 = vand.u32 %v369, 4294901760
        %2352 = vmatmul.mubr.f32.gmra.mrb[0].mxu0 %v2351
        %v2353 = vpop.f32.mrb[0].mxu0
        %v2354 = vadd.f32 %v2162, %v2353
        %v2355 = vpop.f32.mrb[0].mxu0
        %2356 = vmatprep.mubr.f32.mxu0 0.0
        %v2357 = vand.u32 %v372, 4294901760
        %2358 = vmatmul.mubr.f32.gmra.mrb[0].mxu0 %v2357
        %v2359 = vpop.f32.mrb[0].mxu0
        %v2360 = vadd.f32 %v2170, %v2359
        %v2361 = vpop.f32.mrb[0].mxu0
        %2362 = vmatprep.mubr.f32.mxu0 0.0
        %v2363 = vand.u32 %v375, 4294901760
        %2364 = vmatmul.mubr.f32.gmra.mrb[0].mxu0 %v2363
        %v2365 = vpop.f32.mrb[0].mxu0
        %v2366 = vadd.f32 %v2178, %v2365
        %v2367 = vpop.f32.mrb[0].mxu0
        %2368 = vmatprep.mubr.f32.mxu0 0.0
        %v2369 = vand.u32 %v378, 4294901760
        %2370 = vmatmul.mubr.f32.gmra.mrb[0].mxu0 %v2369
        %v2371 = vpop.f32.mrb[0].mxu0
        %v2372 = vadd.f32 %v2186, %v2371
        %v2373 = vpop.f32.mrb[0].mxu0
        %2374 = vmatprep.mubr.f32.mxu0 0.0
        %v2375 = vand.u32 %v381, 4294901760
        %2376 = vmatmul.mubr.f32.gmra.mrb[0].mxu0 %v2375
        %v2377 = vpop.f32.mrb[0].mxu0
        %v2378 = vadd.f32 %v2194, %v2377
        %v2379 = vpop.f32.mrb[0].mxu0
        %2380 = vmatprep.mubr.f32.mxu0 0.0
        %v2381 = vand.u32 %v384, 4294901760
        %2382 = vmatmul.mubr.f32.gmra.mrb[0].mxu0 %v2381
        %v2383 = vpop.f32.mrb[0].mxu0
        %v2384 = vadd.f32 %v2202, %v2383
        %v2385 = vpop.f32.mrb[0].mxu0
        %2386 = vmatprep.mubr.f32.mxu0 0.0
        %v2387 = vand.u32 %v387, 4294901760
        %2388 = vmatmul.mubr.f32.gmra.mrb[0].mxu0 %v2387
        %v2389 = vpop.f32.mrb[0].mxu0
        %v2390 = vadd.f32 %v2210, %v2389
        %v2391 = vpop.f32.mrb[0].mxu0
        %2392 = vmatprep.mubr.f32.mxu0 0.0
        %v2393 = vand.u32 %v390, 4294901760
        %2394 = vmatmul.mubr.f32.gmra.mrb[0].mxu0 %v2393
        %v2395 = vpop.f32.mrb[0].mxu0
        %v2396 = vadd.f32 %v2218, %v2395
        %v2397 = vpop.f32.mrb[0].mxu0
        %2398 = vmatprep.mubr.f32.mxu0 0.0
        %v2399 = vand.u32 %v393, 4294901760
        %2400 = vmatmul.mubr.f32.gmra.mrb[0].mxu0 %v2399
        %v2401 = vpop.f32.mrb[0].mxu0
        %v2402 = vadd.f32 %v2226, %v2401
        %v2403 = vpop.f32.mrb[0].mxu0
        %2404 = vmatprep.mubr.f32.mxu0 0.0
        %v2405 = vand.u32 %v396, 4294901760
        %2406 = vmatmul.mubr.f32.gmra.mrb[0].mxu0 %v2405
        %v2407 = vpop.f32.mrb[0].mxu0
        %v2408 = vadd.f32 %v2234, %v2407
        %v2409 = vpop.f32.mrb[0].mxu0
        %2410 = vmatprep.mubr.f32.mxu0 0.0
        %v2411 = vand.u32 %v399, 4294901760
        %2412 = vmatmul.mubr.f32.gmra.mrb[0].mxu0 %v2411
        %v2413 = vpop.f32.mrb[0].mxu0
        %v2414 = vadd.f32 %v2242, %v2413
        %v2415 = vpop.f32.mrb[0].mxu0
        %2416 = vmatprep.mubr.f32.mxu0 0.0
        %v2417 = vand.u32 %v402, 4294901760
        %2418 = vmatmul.mubr.f32.gmra.mrb[0].mxu0 %v2417
        %v2419 = vpop.f32.mrb[0].mxu0
        %v2420 = vadd.f32 %v2250, %v2419
        %v2421 = vpop.f32.mrb[0].mxu0
        %2422 = vmatprep.mubr.f32.mxu0 0.0
        %v2423 = vand.u32 %v405, 4294901760
        %2424 = vmatmul.mubr.f32.gmra.mrb[0].mxu0 %v2423
        %v2425 = vpop.f32.mrb[0].mxu0
        %v2426 = vadd.f32 %v2258, %v2425
        %v2427 = vpop.f32.mrb[0].mxu0
        %2428 = vmatprep.mubr.f32.mxu0 0.0
        %v2429 = vand.u32 %v408, 4294901760
        %2430 = vmatmul.mubr.f32.gmra.mrb[0].mxu0 %v2429
        %v2431 = vpop.f32.mrb[0].mxu0
        %v2432 = vadd.f32 %v2266, %v2431
        %v2433 = vpop.f32.mrb[0].mxu0
        %2434 = vmatprep.mubr.f32.mxu0 0.0
        %v2435 = vand.u32 %v411, 4294901760
        %2436 = vmatmul.mubr.f32.gmra.mrb[0].mxu0 %v2435
        %v2437 = vpop.f32.mrb[0].mxu0
        %v2438 = vadd.f32 %v2274, %v2437
        %v2439 = vpop.f32.mrb[0].mxu0
        %2440 = vdwg.mxu0
        %2441 = vmatprep.subr.mxu0 0.0
        %v2442 = vand.u32 %v1510, 4294901760
        %2443 = vmatpush1.msra.mxu0 %v2442
        %2444 = vmatprep.subr.mxu0 0.0
        %2445 = vmatpush1.msra.mxu0 0.0
        %2446 = vmatprep.subr.mxu0 0.0
        %2447 = vmatpush1.msra.mxu0 0.0
        %2448 = vmatprep.subr.mxu0 0.0
        %2449 = vmatpush1.msra.mxu0 0.0
        %2450 = vmatprep.subr.mxu0 0.0
        %2451 = vmatpush1.msra.mxu0 0.0
        %2452 = vmatprep.subr.mxu0 0.0
        %2453 = vmatpush1.msra.mxu0 0.0
        %2454 = vmatprep.subr.mxu0 0.0
        %2455 = vmatpush1.msra.mxu0 0.0
        %2456 = vmatprep.subr.mxu0 0.0
        %2457 = vmatpush1.msra.mxu0 0.0
        %2458 = vmatprep.subr.mxu0 0.0
        %2459 = vmatpush1.msra.mxu0 0.0
        %2460 = vmatprep.subr.mxu0 0.0
        %2461 = vmatpush1.msra.mxu0 0.0
        %2462 = vmatprep.subr.mxu0 0.0
        %2463 = vmatpush1.msra.mxu0 0.0
        %2464 = vmatprep.subr.mxu0 0.0
        %2465 = vmatpush1.msra.mxu0 0.0
        %2466 = vmatprep.subr.mxu0 0.0
        %2467 = vmatpush1.msra.mxu0 0.0
        %2468 = vmatprep.subr.mxu0 0.0
        %2469 = vmatpush1.msra.mxu0 0.0
        %2470 = vmatprep.subr.mxu0 0.0
        %2471 = vmatpush1.msra.mxu0 0.0
        %2472 = vmatprep.subr.mxu0 0.0
        %2473 = vmatpush1.msra.mxu0 0.0
        %2474 = vmatprep.subr.mxu0 0.0
        %2475 = vmatpush1.msra.mxu0 0.0
        %2476 = vmatprep.subr.mxu0 0.0
        %2477 = vmatpush1.msra.mxu0 0.0
        %2478 = vmatprep.subr.mxu0 0.0
        %2479 = vmatpush1.msra.mxu0 0.0
        %2480 = vmatprep.subr.mxu0 0.0
        %2481 = vmatpush1.msra.mxu0 0.0
        %2482 = vmatprep.subr.mxu0 0.0
        %2483 = vmatpush1.msra.mxu0 0.0
        %2484 = vmatprep.subr.mxu0 0.0
        %2485 = vmatpush1.msra.mxu0 0.0
        %2486 = vmatprep.subr.mxu0 0.0
        %2487 = vmatpush1.msra.mxu0 0.0
        %2488 = vmatprep.subr.mxu0 0.0
        %2489 = vmatpush1.msra.mxu0 0.0
        %2490 = vmatprep.subr.mxu0 0.0
        %2491 = vmatpush1.msra.mxu0 0.0
        %2492 = vmatprep.subr.mxu0 0.0
        %2493 = vmatpush1.msra.mxu0 0.0
        %2494 = vmatprep.subr.mxu0 0.0
        %2495 = vmatpush1.msra.mxu0 0.0
        %2496 = vmatprep.subr.mxu0 0.0
        %2497 = vmatpush1.msra.mxu0 0.0
        %2498 = vmatprep.subr.mxu0 0.0
        %2499 = vmatpush1.msra.mxu0 0.0
        %2500 = vmatprep.subr.mxu0 0.0
        %2501 = vmatpush1.msra.mxu0 0.0
        %2502 = vmatprep.subr.mxu0 0.0
        %2503 = vmatpush1.msra.mxu0 0.0
        %2504 = vmatprep.subr.mxu0 0.0
        %2505 = vmatpush1.msra.mxu0 0.0
        %2506 = vmatprep.mubr.f32.mxu0 0.0
        %v2507 = vand.u32 %v366, 4294901760
        %2508 = vmatmul.mubr.f32.gmra.mrb[0].mxu0 %v2507
        %v2509 = vpop.f32.mrb[0].mxu0
        %v2510 = vadd.f32 %v2348, %v2509
        %v2511 = vpop.f32.mrb[0].mxu0
        %2512 = vmatprep.mubr.f32.mxu0 0.0
        %v2513 = vand.u32 %v369, 4294901760
        %2514 = vmatmul.mubr.f32.gmra.mrb[0].mxu0 %v2513
        %v2515 = vpop.f32.mrb[0].mxu0
        %v2516 = vadd.f32 %v2354, %v2515
        %v2517 = vpop.f32.mrb[0].mxu0
        %2518 = vmatprep.mubr.f32.mxu0 0.0
        %v2519 = vand.u32 %v372, 4294901760
        %2520 = vmatmul.mubr.f32.gmra.mrb[0].mxu0 %v2519
        %v2521 = vpop.f32.mrb[0].mxu0
        %v2522 = vadd.f32 %v2360, %v2521
        %v2523 = vpop.f32.mrb[0].mxu0
        %2524 = vmatprep.mubr.f32.mxu0 0.0
        %v2525 = vand.u32 %v375, 4294901760
        %2526 = vmatmul.mubr.f32.gmra.mrb[0].mxu0 %v2525
        %v2527 = vpop.f32.mrb[0].mxu0
        %v2528 = vadd.f32 %v2366, %v2527
        %v2529 = vpop.f32.mrb[0].mxu0
        %2530 = vmatprep.mubr.f32.mxu0 0.0
        %v2531 = vand.u32 %v378, 4294901760
        %2532 = vmatmul.mubr.f32.gmra.mrb[0].mxu0 %v2531
        %v2533 = vpop.f32.mrb[0].mxu0
        %v2534 = vadd.f32 %v2372, %v2533
        %v2535 = vpop.f32.mrb[0].mxu0
        %2536 = vmatprep.mubr.f32.mxu0 0.0
        %v2537 = vand.u32 %v381, 4294901760
        %2538 = vmatmul.mubr.f32.gmra.mrb[0].mxu0 %v2537
        %v2539 = vpop.f32.mrb[0].mxu0
        %v2540 = vadd.f32 %v2378, %v2539
        %v2541 = vpop.f32.mrb[0].mxu0
        %2542 = vmatprep.mubr.f32.mxu0 0.0
        %v2543 = vand.u32 %v384, 4294901760
        %2544 = vmatmul.mubr.f32.gmra.mrb[0].mxu0 %v2543
        %v2545 = vpop.f32.mrb[0].mxu0
        %v2546 = vadd.f32 %v2384, %v2545
        %v2547 = vpop.f32.mrb[0].mxu0
        %2548 = vmatprep.mubr.f32.mxu0 0.0
        %v2549 = vand.u32 %v387, 4294901760
        %2550 = vmatmul.mubr.f32.gmra.mrb[0].mxu0 %v2549
        %v2551 = vpop.f32.mrb[0].mxu0
        %v2552 = vadd.f32 %v2390, %v2551
        %v2553 = vpop.f32.mrb[0].mxu0
        %2554 = vmatprep.mubr.f32.mxu0 0.0
        %v2555 = vand.u32 %v390, 4294901760
        %2556 = vmatmul.mubr.f32.gmra.mrb[0].mxu0 %v2555
        %v2557 = vpop.f32.mrb[0].mxu0
        %v2558 = vadd.f32 %v2396, %v2557
        %v2559 = vpop.f32.mrb[0].mxu0
        %2560 = vmatprep.mubr.f32.mxu0 0.0
        %v2561 = vand.u32 %v393, 4294901760
        %2562 = vmatmul.mubr.f32.gmra.mrb[0].mxu0 %v2561
        %v2563 = vpop.f32.mrb[0].mxu0
        %v2564 = vadd.f32 %v2402, %v2563
        %v2565 = vpop.f32.mrb[0].mxu0
        %2566 = vmatprep.mubr.f32.mxu0 0.0
        %v2567 = vand.u32 %v396, 4294901760
        %2568 = vmatmul.mubr.f32.gmra.mrb[0].mxu0 %v2567
        %v2569 = vpop.f32.mrb[0].mxu0
        %v2570 = vadd.f32 %v2408, %v2569
        %v2571 = vpop.f32.mrb[0].mxu0
        %2572 = vmatprep.mubr.f32.mxu0 0.0
        %v2573 = vand.u32 %v399, 4294901760
        %2574 = vmatmul.mubr.f32.gmra.mrb[0].mxu0 %v2573
        %v2575 = vpop.f32.mrb[0].mxu0
        %v2576 = vadd.f32 %v2414, %v2575
        %v2577 = vpop.f32.mrb[0].mxu0
        %2578 = vmatprep.mubr.f32.mxu0 0.0
        %v2579 = vand.u32 %v402, 4294901760
        %2580 = vmatmul.mubr.f32.gmra.mrb[0].mxu0 %v2579
        %v2581 = vpop.f32.mrb[0].mxu0
        %v2582 = vadd.f32 %v2420, %v2581
        %v2583 = vpop.f32.mrb[0].mxu0
        %2584 = vmatprep.mubr.f32.mxu0 0.0
        %v2585 = vand.u32 %v405, 4294901760
        %2586 = vmatmul.mubr.f32.gmra.mrb[0].mxu0 %v2585
        %v2587 = vpop.f32.mrb[0].mxu0
        %v2588 = vadd.f32 %v2426, %v2587
        %v2589 = vpop.f32.mrb[0].mxu0
        %2590 = vmatprep.mubr.f32.mxu0 0.0
        %v2591 = vand.u32 %v408, 4294901760
        %2592 = vmatmul.mubr.f32.gmra.mrb[0].mxu0 %v2591
        %v2593 = vpop.f32.mrb[0].mxu0
        %v2594 = vadd.f32 %v2432, %v2593
        %v2595 = vpop.f32.mrb[0].mxu0
        %2596 = vmatprep.mubr.f32.mxu0 0.0
        %v2597 = vand.u32 %v411, 4294901760
        %2598 = vmatmul.mubr.f32.gmra.mrb[0].mxu0 %v2597
        %v2599 = vpop.f32.mrb[0].mxu0
        %v2600 = vadd.f32 %v2438, %v2599
        %v2601 = vpop.f32.mrb[0].mxu0
        %2602 = vdwg.mxu0
        %v2603 = vsub.f32 %v249, %v323
        %v2604 = vsub.f32 %v250, %v323
        %v2605 = vsub.f32 %v251, %v323
        %v2606 = vsub.f32 %v252, %v323
        %v2607 = vsub.f32 %v253, %v323
        %v2608 = vsub.f32 %v254, %v323
        %v2609 = vsub.f32 %v255, %v323
        %v2610 = vsub.f32 %v256, %v323
        %v2611 = vsub.f32 %v257, %v323
        %v2612 = vsub.f32 %v258, %v323
        %v2613 = vsub.f32 %v259, %v323
        %v2614 = vsub.f32 %v260, %v323
        %v2615 = vsub.f32 %v261, %v323
        %v2616 = vsub.f32 %v262, %v323
        %v2617 = vsub.f32 %v263, %v323
        %v2618 = vsub.f32 %v264, %v323
        %v2619 = vmul.f32 %v2603, %v1415
        %v2620 = vmul.f32 %v2604, %v1421
        %v2621 = vmul.f32 %v2605, %v1427
        %v2622 = vmul.f32 %v2606, %v1433
        %v2623 = vmul.f32 %v2607, %v1439
        %v2624 = vmul.f32 %v2608, %v1445
        %v2625 = vmul.f32 %v2609, %v1451
        %v2626 = vmul.f32 %v2610, %v1457
        %v2627 = vmul.f32 %v2611, %v1463
        %v2628 = vmul.f32 %v2612, %v1469
        %v2629 = vmul.f32 %v2613, %v1475
        %v2630 = vmul.f32 %v2614, %v1481
        %v2631 = vmul.f32 %v2615, %v1487
        %v2632 = vmul.f32 %v2616, %v1493
        %v2633 = vmul.f32 %v2617, %v1499
        %v2634 = vmul.f32 %v2618, %v1505
        %v2635 = vadd.f32 %v2619, %v2510
        %v2636 = vadd.f32 %v2620, %v2516
        %v2637 = vadd.f32 %v2621, %v2522
        %v2638 = vadd.f32 %v2622, %v2528
        %v2639 = vadd.f32 %v2623, %v2534
        %v2640 = vadd.f32 %v2624, %v2540
        %v2641 = vadd.f32 %v2625, %v2546
        %v2642 = vadd.f32 %v2626, %v2552
        %v2643 = vadd.f32 %v2627, %v2558
        %v2644 = vadd.f32 %v2628, %v2564
        %v2645 = vadd.f32 %v2629, %v2570
        %v2646 = vadd.f32 %v2630, %v2576
        %v2647 = vadd.f32 %v2631, %v2582
        %v2648 = vadd.f32 %v2632, %v2588
        %v2649 = vadd.f32 %v2633, %v2594
        %v2650 = vadd.f32 %v2634, %v2600
        %2651 = vst [vmem:[%s240] sm:$0xff] %v2635
        %2652 = vst [vmem:[%s240 + $0x8] sm:$0xff] %v2636
        %2653 = vst [vmem:[%s240 + $0x10] sm:$0xff] %v2637
        %2654 = vst [vmem:[%s240 + $0x18] sm:$0xff] %v2638
        %2655 = vst [vmem:[%s240 + $0x20] sm:$0xff] %v2639
        %2656 = vst [vmem:[%s240 + $0x28] sm:$0xff] %v2640
        %2657 = vst [vmem:[%s240 + $0x30] sm:$0xff] %v2641
        %2658 = vst [vmem:[%s240 + $0x38] sm:$0xff] %v2642
        %2659 = vst [vmem:[%s240 + $0x40] sm:$0xff] %v2643
        %2660 = vst [vmem:[%s240 + $0x48] sm:$0xff] %v2644
        %2661 = vst [vmem:[%s240 + $0x50] sm:$0xff] %v2645
        %2662 = vst [vmem:[%s240 + $0x58] sm:$0xff] %v2646
        %2663 = vst [vmem:[%s240 + $0x60] sm:$0xff] %v2647
        %2664 = vst [vmem:[%s240 + $0x68] sm:$0xff] %v2648
        %2665 = vst [vmem:[%s240 + $0x70] sm:$0xff] %v2649
        %2666 = vst [vmem:[%s240 + $0x78] sm:$0xff] %v2650
        %s2667 = sand.u32 %s128, 1
        %s2668 = scalar_lea.sflag [#allocation4], %s2667
        %s2669 = sand.u32 %s128, 1
        %s2670 = smul.addr %s2669, 128
        %s2671 = scalar_lea.vmem [#allocation5], %s2670
        // Predicated region
        $region41: #{tpu_custom_call.1} parent=35 // pred_check
          %p2672 = pneg %p138
        $region42: #{tpu_custom_call.1} parent=35 // pred_check_branch
          %2674 = sbr.rel (%p2672) target = $region44
        $region43: #{tpu_custom_call.1} parent=35 // pred_region
          %s2676 = ssub.s32 2048, 2048
          %2677 = vsyncadd %s2668, %s2676
          %s2678 = smul.addr %s21, 128
          %s2679 = scalar_lea.hbm %s4, %s2678
          %s2680 = sshll.u32 %s2671, 4
          %s2681 = int_to_ptr.vmem [resolvable:$true] %s2680
          %2686 = dma.vmem_to_hbm [thread:$0]  %s2681, 2048, %s2679, %s2668, 128, 256, 8
        $region44: #{tpu_custom_call.1} parent=35 // pred_fallthru
          _
      $region36: #{tpu_custom_call.1} parent=5 // pred_fallthru
        _
      %p2687 = scmp.le.s32.totalorder 2, %s16
      // Predicated region
      $region45: #{tpu_custom_call.1} parent=5 // pred_check
        %p2688 = pneg %p2687
      $region46: #{tpu_custom_call.1} parent=5 // pred_check_branch
        %2690 = sbr.rel (%p2688) target = $region48
      $region47: #{tpu_custom_call.1} parent=5 // pred_region
        %s2691 = ssub.s32 %s16, 2
        // Predicated region
        $region49: #{tpu_custom_call.1} parent=47 // pred_check
          %p2692 = pneg %p144
        $region50: #{tpu_custom_call.1} parent=47 // pred_check_branch
          %2694 = sbr.rel (%p2692) target = $region52
        $region51: #{tpu_custom_call.1} parent=47 // pred_region
          %s2695 = sand.u32 %s129, 1
          %s2696 = scalar_lea.sflag [#allocation4], %s2695
          %s2697 = sand.u32 %s129, 1
          %s2698 = smul.addr %s2697, 128
          %s2699 = scalar_lea.vmem [#allocation5], %s2698
          %2700 = dma.done %s2696, 2048
        $region52: #{tpu_custom_call.1} parent=47 // pred_fallthru
          _
      $region48: #{tpu_custom_call.1} parent=5 // pred_fallthru
        _
    $region6: #{tpu_custom_call.1} parent=1 // loop_footer
      %s20 = sadd.s32 1, %s16
    $region7: #{tpu_custom_call.1} parent=1 // loop_footer_branch
      %15 = sbr.rel target = $region3
    $region8: #{tpu_custom_call.1} parent=1 // loop_exit
      _
    %2701 = vsyncpa [#allocation3], 1
    %s2702 = scalar_lea.sflag [#allocation3], 1
    %2703 = vsyncpa %s2702, 1
    %2704 = vsyncpa [#allocation4], 1
    %s2705 = scalar_lea.sflag [#allocation4], 1
    %2706 = vsyncpa %s2705, 1

</llo_original>
